<compile_context>
chip_gen: v7x
topology: tpu7x:2x2x1
jax: 0.10.0
libtpu: 0.0.40
codegen_flags: <defaults>
</compile_context>

<pallas_src>
import jax
import jax.numpy as jnp
import numpy as np
from jax import lax
from jax.experimental import pallas as pl
from jax.experimental.pallas import tpu as pltpu

EPS_ATTN = 1e-6
EPS_NORM = 1e-6


def _encoder_layer_kernel(
    x_ref,
    segmask_ref, segmaskT_ref, bdmask_ref,
    wq_ref, bq_ref, wk_ref, bk_ref, wv_ref, bv_ref, wo_ref, bo_ref,
    alpha2_ref, bias2_ref,
    w1_ref, b1_ref, w2_ref, b2_ref,
    out_ref,
):
    x = x_ref[...]                                  # (L, D) f32 (batch dim squeezed)
    L, D = x.shape

    def mm(a_bf16, w_ref, b_ref):
        # bf16 MXU operands, f32 accumulation, f32 bias add.
        return jnp.dot(a_bf16, w_ref[...], preferred_element_type=jnp.float32) + b_ref[...]

    xb = x.astype(jnp.bfloat16)                     # hoisted: reused for q/k/v projections

    # ---------------- Flow attention (all heads at once) ----------------
    q = jax.nn.sigmoid(mm(xb, wq_ref, bq_ref))      # (L, D) f32
    k = jax.nn.sigmoid(mm(xb, wk_ref, bk_ref))      # (L, D) f32
    v = mm(xb, wv_ref, bv_ref)                      # (L, D) f32

    seg_mask = segmask_ref[...]                     # (D, H) resident, DMA'd once
    seg_mask_t = segmaskT_ref[...]                  # (H, D)
    bd_mask = bdmask_ref[...]                       # (D, D) block-diagonal per head

    eps = EPS_ATTN
    qp = q + eps
    kp = k + eps
    k_sum = jnp.sum(k, axis=0, keepdims=True)       # (1, D)
    q_sum = jnp.sum(q, axis=0, keepdims=True)       # (1, D)

    # (1) sink_incoming / source_outgoing normalizers: one stacked (2L,D)x(D,H) call.
    t01 = jnp.concatenate([qp * (k_sum + eps), kp * (q_sum + eps)], axis=0)   # (2L, D)
    s01 = jnp.dot(t01, seg_mask, preferred_element_type=jnp.float32)          # (2L, H)
    sink_in = 1.0 / s01[:L]        # exact reciprocal (feeds conservation terms)
    src_out = 1.0 / s01[L:]

    # (2) expand src_out / sink_in back to (L, D): one stacked (2L,H)x(H,D) call.
    e01 = jnp.dot(jnp.concatenate([src_out, sink_in], axis=0), seg_mask_t,
                  preferred_element_type=jnp.float32)                          # (2L, D)
    src_out_d = e01[:L]
    sink_in_d = e01[L:]

    ksrc_sum = jnp.sum(k * src_out_d, axis=0, keepdims=True)                   # (1, D)
    qsink_sum = jnp.sum(q * sink_in_d, axis=0, keepdims=True)                  # (1, D)

    # (3) conserved sink / source: one stacked call.
    t23 = jnp.concatenate([qp * (ksrc_sum + eps), kp * (qsink_sum + eps)], axis=0)
    s23 = jnp.dot(t23, seg_mask, preferred_element_type=jnp.float32)           # (2L, H)
    cons_sink = s23[:L]
    cons_src = jnp.clip(s23[L:], -1.0, 1.0)

    sink_alloc = jax.nn.sigmoid(cons_sink)          # L == S so the L/S factor is 1
    m = jnp.max(cons_src, axis=0, keepdims=True)    # softmax over sequence, scaled by S (= L)
    ee = jnp.exp(cons_src - m)
    src_comp = ee * pl.reciprocal(jnp.sum(ee, axis=0, keepdims=True), approx=True) * float(L)

    # (4) expand src_comp / sink_alloc: one stacked call.
    e23 = jnp.dot(jnp.concatenate([src_comp, sink_alloc], axis=0), seg_mask_t,
                  preferred_element_type=jnp.float32)                          # (2L, D)
    src_comp_d = e23[:L]
    sink_alloc_d = e23[L:]

    # kv / qkv for all heads: full-width (D, D) matmuls with bf16 operands,
    # f32 accumulation, result masked to the per-head block-diagonal.
    v_comp = (v * src_comp_d).astype(jnp.bfloat16)                             # (L, D)
    kv = lax.dot_general(k.astype(jnp.bfloat16), v_comp,
                         dimension_numbers=(((0,), (0,)), ((), ())),
                         preferred_element_type=jnp.float32)                   # (D, D)
    kv = kv * bd_mask
    qs = (q * sink_in_d).astype(jnp.bfloat16)
    qkv = jnp.dot(qs, kv.astype(jnp.bfloat16), preferred_element_type=jnp.float32)  # (L, D)
    attn_heads = qkv * sink_alloc_d

    # out projection + residual 1 (dropout = identity)
    x1 = x + mm(attn_heads.astype(jnp.bfloat16), wo_ref, bo_ref)

    # ---------------- Norm 2 (torch.std default: unbiased, eps on std) ------------
    mean = jnp.mean(x1, axis=1, keepdims=True)
    xc = x1 - mean
    var_u = jnp.sum(xc * xc, axis=1, keepdims=True) * (1.0 / float(D - 1))
    inv_std = pl.reciprocal(jnp.sqrt(var_u) + EPS_NORM, approx=True)
    x2 = alpha2_ref[...] * xc * inv_std + bias2_ref[...]

    # ---------------- FeedForward + residual 2 (dropout = identity) ---------------
    # TODO(synk): for very large L / d_ff on v7x (64 MiB VMEM) tile this tail over L.
    h1 = jnp.maximum(mm(x2.astype(jnp.bfloat16), w1_ref, b1_ref), 0.0)
    ff = mm(h1.astype(jnp.bfloat16), w2_ref, b2_ref)

    out_ref[...] = x1 + ff


def _pick_vmem_limit():
    # ~3/4 of physical VMEM, capped at 96 MiB (v5e/v6e: 96 MiB, v7x: 48 MiB).
    try:
        cap = pltpu.get_tpu_info().vmem_capacity_bytes
        return int(min(cap * 3 // 4, 96 * 1024 * 1024))
    except Exception:
        return 48 * 1024 * 1024


def prepare_params(params, *, n_heads):
    """One-time prep: bf16 weight cast + head-segment masks (0/1, exact)."""
    D = params["wq"].shape[0]
    dh = D // n_heads
    H = n_heads
    hid = np.arange(D) // dh
    seg_mask = (hid[:, None] == np.arange(H)[None, :]).astype(np.float32)   # (D, H)
    seg_mask_t = np.ascontiguousarray(seg_mask.T)                           # (H, D)
    bd_mask = (hid[:, None] == hid[None, :]).astype(np.float32)             # (D, D)

    bf = lambda w: jnp.asarray(w, jnp.bfloat16)
    f32 = lambda w: jnp.asarray(w, jnp.float32)
    return {
        "seg_mask": jnp.asarray(seg_mask), "seg_mask_t": jnp.asarray(seg_mask_t),
        "bd_mask": jnp.asarray(bd_mask),
        "wq": bf(params["wq"]), "bq": f32(params["bq"]),
        "wk": bf(params["wk"]), "bk": f32(params["bk"]),
        "wv": bf(params["wv"]), "bv": f32(params["bv"]),
        "wo": bf(params["wo"]), "bo": f32(params["bo"]),
        "alpha2": f32(params["alpha2"]), "bias2": f32(params["bias2"]),
        "w1": bf(params["w1"]), "b1": f32(params["b1"]),
        "w2": bf(params["w2"]), "b2": f32(params["b2"]),
    }


def encoder_layer_pallas(x, prepared):
    B, L, D = x.shape
    H = prepared["seg_mask"].shape[1]
    d_ff = prepared["w1"].shape[1]

    # constant index_map -> block DMA'd once, resident across batch grid steps
    full2d = lambda shape: pl.BlockSpec(shape, lambda b: (0, 0))

    return pl.pallas_call(
        _encoder_layer_kernel,
        out_shape=jax.ShapeDtypeStruct((B, L, D), jnp.float32),
        grid=(B,),
        in_specs=[
            # batch dim squeezed: kernel sees a plain (L, D) ref
            pl.BlockSpec((None, L, D), lambda b: (b, 0, 0)),   # x
            full2d((D, H)), full2d((H, D)), full2d((D, D)),    # seg_mask, seg_mask_t, bd_mask
            full2d((D, D)), full2d((1, D)),                    # Wq, bq
            full2d((D, D)), full2d((1, D)),                    # Wk, bk
            full2d((D, D)), full2d((1, D)),                    # Wv, bv
            full2d((D, D)), full2d((1, D)),                    # Wo, bo
            full2d((1, D)), full2d((1, D)),                    # norm_2 alpha, bias
            full2d((D, d_ff)), full2d((1, d_ff)),              # ff W1, b1
            full2d((d_ff, D)), full2d((1, D)),                 # ff W2, b2
        ],
        out_specs=pl.BlockSpec((None, L, D), lambda b: (b, 0, 0)),
        compiler_params=pltpu.CompilerParams(
            dimension_semantics=("parallel",),
            vmem_limit_bytes=_pick_vmem_limit(),
        ),
    )(
        x,
        prepared["seg_mask"], prepared["seg_mask_t"], prepared["bd_mask"],
        prepared["wq"], prepared["bq"], prepared["wk"], prepared["bk"],
        prepared["wv"], prepared["bv"], prepared["wo"], prepared["bo"],
        prepared["alpha2"], prepared["bias2"],
        prepared["w1"], prepared["b1"], prepared["w2"], prepared["b2"],
    )


# ---------------- pure-JAX reference (mirrors the PyTorch forward, f32) ----------------
def encoder_layer_ref(x, p, *, n_heads):
    B, L, D = x.shape
    dh = D // n_heads

    def proj(z, w, b):
        return z @ w + b[0]

    q = jax.nn.sigmoid(proj(x, p["wq"], p["bq"])).reshape(B, L, n_heads, dh).transpose(0, 2, 1, 3)
    k = jax.nn.sigmoid(proj(x, p["wk"], p["bk"])).reshape(B, L, n_heads, dh).transpose(0, 2, 1, 3)
    v = proj(x, p["wv"], p["bv"]).reshape(B, L, n_heads, dh).transpose(0, 2, 1, 3)
    eps = EPS_ATTN
    sink_in = 1.0 / jnp.einsum("nhld,nhd->nhl", q + eps, k.sum(axis=2) + eps)
    src_out = 1.0 / jnp.einsum("nhld,nhd->nhl", k + eps, q.sum(axis=2) + eps)
    cons_sink = jnp.einsum("nhld,nhd->nhl", q + eps, (k * src_out[..., None]).sum(axis=2) + eps)
    cons_src = jnp.einsum("nhld,nhd->nhl", k + eps, (q * sink_in[..., None]).sum(axis=2) + eps)
    cons_src = jnp.clip(cons_src, -1.0, 1.0)
    sink_alloc = jax.nn.sigmoid(cons_sink * (float(L) / float(L)))
    src_comp = jax.nn.softmax(cons_src, axis=-1) * float(L)
    kv = jnp.einsum("nhld,nhlm->nhdm", k, v * src_comp[..., None])
    qkv = jnp.einsum("nhld,nhdm->nhlm", q * sink_in[..., None], kv)
    attn = (qkv * sink_alloc[..., None]).transpose(0, 2, 1, 3).reshape(B, L, D)
    attn = proj(attn, p["wo"], p["bo"])

    x1 = x + attn
    mean = x1.mean(axis=-1, keepdims=True)
    std = jnp.sqrt(jnp.sum((x1 - mean) ** 2, axis=-1, keepdims=True) / (D - 1))
    x2 = p["alpha2"][0] * (x1 - mean) / (std + EPS_NORM) + p["bias2"][0]
    h1 = jax.nn.relu(proj(x2, p["w1"], p["b1"]))
    ff = proj(h1, p["w2"], p["b2"])
    return x1 + ff


def make_params(key, d_model, d_ff):
    ks = jax.random.split(key, 12)
    n = lambda k, shape, s=0.1: (s * jax.random.normal(k, shape)).astype(jnp.float32)
    return {
        # Linear weights stored as (in, out)  (== torch weight transposed)
        "wq": n(ks[0], (d_model, d_model)), "bq": n(ks[1], (1, d_model)),
        "wk": n(ks[2], (d_model, d_model)), "bk": n(ks[3], (1, d_model)),
        "wv": n(ks[4], (d_model, d_model)), "bv": n(ks[5], (1, d_model)),
        "wo": n(ks[6], (d_model, d_model)), "bo": n(ks[7], (1, d_model)),
        # Norm params are initialized to ones in the module
        "alpha2": jnp.ones((1, d_model), jnp.float32),
        "bias2": jnp.ones((1, d_model), jnp.float32),
        "w1": n(ks[8], (d_model, d_ff)), "b1": n(ks[9], (1, d_ff)),
        "w2": n(ks[10], (d_ff, d_model)), "b2": n(ks[11], (1, d_model)),
    }


if __name__ == "__main__":
    B, L, D = 2, 8, 32
    N_HEADS = 4
    D_FF = 128

    key = jax.random.PRNGKey(0)
    kx, kp = jax.random.split(key)
    x = jax.random.normal(kx, (B, L, D), dtype=jnp.float32)
    params = make_params(kp, D, D_FF)
    prepared = prepare_params(params, n_heads=N_HEADS)   # one-time bf16 cast + head masks

    out = encoder_layer_pallas(x, prepared)
    out = jax.block_until_ready(out)

    ref = encoder_layer_ref(x, params, n_heads=N_HEADS)
    # Tolerance accounts for bf16 MXU operands + approx reciprocals (f32 reference).
    np.testing.assert_allclose(np.asarray(out), np.asarray(ref), rtol=3e-2, atol=3e-2)

    print("KERNEL_OK")
</pallas_src>

<mosaic_0001>
module attributes {stable_mosaic.version = 11 : i64} {
  func.func @_encoder_layer_kernel(%arg0: i32, %arg1: memref<1x8x32xf32, #tpu.memory_space<vmem>>, %arg2: memref<32x4xf32, #tpu.memory_space<vmem>>, %arg3: memref<4x32xf32, #tpu.memory_space<vmem>>, %arg4: memref<32x32xf32, #tpu.memory_space<vmem>>, %arg5: memref<32x32xbf16, #tpu.memory_space<vmem>>, %arg6: memref<1x32xf32, #tpu.memory_space<vmem>>, %arg7: memref<32x32xbf16, #tpu.memory_space<vmem>>, %arg8: memref<1x32xf32, #tpu.memory_space<vmem>>, %arg9: memref<32x32xbf16, #tpu.memory_space<vmem>>, %arg10: memref<1x32xf32, #tpu.memory_space<vmem>>, %arg11: memref<32x32xbf16, #tpu.memory_space<vmem>>, %arg12: memref<1x32xf32, #tpu.memory_space<vmem>>, %arg13: memref<1x32xf32, #tpu.memory_space<vmem>>, %arg14: memref<1x32xf32, #tpu.memory_space<vmem>>, %arg15: memref<32x128xbf16, #tpu.memory_space<vmem>>, %arg16: memref<1x128xf32, #tpu.memory_space<vmem>>, %arg17: memref<128x32xbf16, #tpu.memory_space<vmem>>, %arg18: memref<1x32xf32, #tpu.memory_space<vmem>>, %arg19: memref<1x8x32xf32, #tpu.memory_space<vmem>>) attributes {dimension_semantics = [#tpu.dimension_semantics<parallel>], iteration_bounds = array<i64: 2>, scalar_prefetch = 0 : i64, scratch_operands = 0 : i64, tpu.core_type = #tpu.core_type<tc>, window_params = [{transform_indices = @transform_0, window_bounds = array<i64: 1, 8, 32>}, {pipeline_mode = #tpu.pipeline_mode<synchronous>, transform_indices = @transform_1, window_bounds = array<i64: 32, 4>}, {pipeline_mode = #tpu.pipeline_mode<synchronous>, transform_indices = @transform_2, window_bounds = array<i64: 4, 32>}, {pipeline_mode = #tpu.pipeline_mode<synchronous>, transform_indices = @transform_3, window_bounds = array<i64: 32, 32>}, {pipeline_mode = #tpu.pipeline_mode<synchronous>, transform_indices = @transform_4, window_bounds = array<i64: 32, 32>}, {pipeline_mode = #tpu.pipeline_mode<synchronous>, transform_indices = @transform_5, window_bounds = array<i64: 1, 32>}, {pipeline_mode = #tpu.pipeline_mode<synchronous>, transform_indices = @transform_6, window_bounds = array<i64: 32, 32>}, {pipeline_mode = #tpu.pipeline_mode<synchronous>, transform_indices = @transform_7, window_bounds = array<i64: 1, 32>}, {pipeline_mode = #tpu.pipeline_mode<synchronous>, transform_indices = @transform_8, window_bounds = array<i64: 32, 32>}, {pipeline_mode = #tpu.pipeline_mode<synchronous>, transform_indices = @transform_9, window_bounds = array<i64: 1, 32>}, {pipeline_mode = #tpu.pipeline_mode<synchronous>, transform_indices = @transform_10, window_bounds = array<i64: 32, 32>}, {pipeline_mode = #tpu.pipeline_mode<synchronous>, transform_indices = @transform_11, window_bounds = array<i64: 1, 32>}, {pipeline_mode = #tpu.pipeline_mode<synchronous>, transform_indices = @transform_12, window_bounds = array<i64: 1, 32>}, {pipeline_mode = #tpu.pipeline_mode<synchronous>, transform_indices = @transform_13, window_bounds = array<i64: 1, 32>}, {pipeline_mode = #tpu.pipeline_mode<synchronous>, transform_indices = @transform_14, window_bounds = array<i64: 32, 128>}, {pipeline_mode = #tpu.pipeline_mode<synchronous>, transform_indices = @transform_15, window_bounds = array<i64: 1, 128>}, {pipeline_mode = #tpu.pipeline_mode<synchronous>, transform_indices = @transform_16, window_bounds = array<i64: 128, 32>}, {pipeline_mode = #tpu.pipeline_mode<synchronous>, transform_indices = @transform_17, window_bounds = array<i64: 1, 32>}, {transform_indices = @transform_18, window_bounds = array<i64: 1, 8, 32>}]} {
    %c0 = arith.constant 0 : index
    %c0_0 = arith.constant 0 : index
    %c0_1 = arith.constant 0 : index
    %0 = vector.load %arg1[%c0, %c0_0, %c0_1] : memref<1x8x32xf32, #tpu.memory_space<vmem>>, vector<1x8x32xf32>
    %1 = vector.shape_cast %0 : vector<1x8x32xf32> to vector<8x32xf32>
    %2 = arith.truncf %1 : vector<8x32xf32> to vector<8x32xbf16>
    %c0_2 = arith.constant 0 : index
    %c0_3 = arith.constant 0 : index
    %3 = vector.load %arg5[%c0_2, %c0_3] : memref<32x32xbf16, #tpu.memory_space<vmem>>, vector<32x32xbf16>
    %cst = arith.constant dense<0.000000e+00> : vector<8x32xf32>
    %4 = tpu.matmul %2, %3, %cst {dimension_numbers = #tpu.dot_dimension_numbers<[1], [0], [0], [1], [0, 0, 1, 1], [], []>} : vector<8x32xbf16>, vector<32x32xbf16>, vector<8x32xf32> -> vector<8x32xf32>
    %c0_4 = arith.constant 0 : index
    %c0_5 = arith.constant 0 : index
    %5 = vector.load %arg6[%c0_4, %c0_5] : memref<1x32xf32, #tpu.memory_space<vmem>>, vector<1x32xf32>
    %6 = vector.broadcast %5 : vector<1x32xf32> to vector<8x32xf32>
    %7 = arith.addf %4, %6 : vector<8x32xf32>
    %8 = arith.negf %7 : vector<8x32xf32>
    %9 = math.exp %8 : vector<8x32xf32>
    %cst_6 = arith.constant 1.000000e+00 : f32
    %10 = vector.broadcast %cst_6 : f32 to vector<8x32xf32>
    %11 = arith.addf %10, %9 : vector<8x32xf32>
    %12 = arith.divf %10, %11 : vector<8x32xf32>
    %c0_7 = arith.constant 0 : index
    %c0_8 = arith.constant 0 : index
    %13 = vector.load %arg7[%c0_7, %c0_8] : memref<32x32xbf16, #tpu.memory_space<vmem>>, vector<32x32xbf16>
    %cst_9 = arith.constant dense<0.000000e+00> : vector<8x32xf32>
    %14 = tpu.matmul %2, %13, %cst_9 {dimension_numbers = #tpu.dot_dimension_numbers<[1], [0], [0], [1], [0, 0, 1, 1], [], []>} : vector<8x32xbf16>, vector<32x32xbf16>, vector<8x32xf32> -> vector<8x32xf32>
    %c0_10 = arith.constant 0 : index
    %c0_11 = arith.constant 0 : index
    %15 = vector.load %arg8[%c0_10, %c0_11] : memref<1x32xf32, #tpu.memory_space<vmem>>, vector<1x32xf32>
    %16 = vector.broadcast %15 : vector<1x32xf32> to vector<8x32xf32>
    %17 = arith.addf %14, %16 : vector<8x32xf32>
    %18 = arith.negf %17 : vector<8x32xf32>
    %19 = math.exp %18 : vector<8x32xf32>
    %cst_12 = arith.constant 1.000000e+00 : f32
    %20 = vector.broadcast %cst_12 : f32 to vector<8x32xf32>
    %21 = arith.addf %20, %19 : vector<8x32xf32>
    %22 = arith.divf %20, %21 : vector<8x32xf32>
    %c0_13 = arith.constant 0 : index
    %c0_14 = arith.constant 0 : index
    %23 = vector.load %arg9[%c0_13, %c0_14] : memref<32x32xbf16, #tpu.memory_space<vmem>>, vector<32x32xbf16>
    %cst_15 = arith.constant dense<0.000000e+00> : vector<8x32xf32>
    %24 = tpu.matmul %2, %23, %cst_15 {dimension_numbers = #tpu.dot_dimension_numbers<[1], [0], [0], [1], [0, 0, 1, 1], [], []>} : vector<8x32xbf16>, vector<32x32xbf16>, vector<8x32xf32> -> vector<8x32xf32>
    %c0_16 = arith.constant 0 : index
    %c0_17 = arith.constant 0 : index
    %25 = vector.load %arg10[%c0_16, %c0_17] : memref<1x32xf32, #tpu.memory_space<vmem>>, vector<1x32xf32>
    %26 = vector.broadcast %25 : vector<1x32xf32> to vector<8x32xf32>
    %27 = arith.addf %24, %26 : vector<8x32xf32>
    %c0_18 = arith.constant 0 : index
    %c0_19 = arith.constant 0 : index
    %28 = vector.load %arg2[%c0_18, %c0_19] : memref<32x4xf32, #tpu.memory_space<vmem>>, vector<32x4xf32>
    %c0_20 = arith.constant 0 : index
    %c0_21 = arith.constant 0 : index
    %29 = vector.load %arg3[%c0_20, %c0_21] : memref<4x32xf32, #tpu.memory_space<vmem>>, vector<4x32xf32>
    %c0_22 = arith.constant 0 : index
    %c0_23 = arith.constant 0 : index
    %30 = vector.load %arg4[%c0_22, %c0_23] : memref<32x32xf32, #tpu.memory_space<vmem>>, vector<32x32xf32>
    %cst_24 = arith.constant 9.99999997E-7 : f32
    %31 = vector.broadcast %cst_24 : f32 to vector<8x32xf32>
    %32 = arith.addf %12, %31 : vector<8x32xf32>
    %cst_25 = arith.constant 9.99999997E-7 : f32
    %33 = vector.broadcast %cst_25 : f32 to vector<8x32xf32>
    %34 = arith.addf %22, %33 : vector<8x32xf32>
    %cst_26 = arith.constant dense<0.000000e+00> : vector<32xf32>
    %35 = vector.multi_reduction <add>, %22, %cst_26 [0] : vector<8x32xf32> to vector<32xf32>
    %36 = vector.shape_cast %35 : vector<32xf32> to vector<1x32xf32>
    %cst_27 = arith.constant dense<0.000000e+00> : vector<32xf32>
    %37 = vector.multi_reduction <add>, %12, %cst_27 [0] : vector<8x32xf32> to vector<32xf32>
    %38 = vector.shape_cast %37 : vector<32xf32> to vector<1x32xf32>
    %cst_28 = arith.constant 9.99999997E-7 : f32
    %39 = vector.broadcast %cst_28 : f32 to vector<1x32xf32>
    %40 = arith.addf %36, %39 : vector<1x32xf32>
    %41 = vector.broadcast %40 : vector<1x32xf32> to vector<8x32xf32>
    %42 = arith.mulf %32, %41 : vector<8x32xf32>
    %cst_29 = arith.constant 9.99999997E-7 : f32
    %43 = vector.broadcast %cst_29 : f32 to vector<1x32xf32>
    %44 = arith.addf %38, %43 : vector<1x32xf32>
    %45 = vector.broadcast %44 : vector<1x32xf32> to vector<8x32xf32>
    %46 = arith.mulf %34, %45 : vector<8x32xf32>
    %47 = tpu.concatenate %42, %46 in 0 : vector<8x32xf32>, vector<8x32xf32> -> vector<16x32xf32>
    %cst_30 = arith.constant dense<0.000000e+00> : vector<16x4xf32>
    %48 = tpu.matmul %47, %28, %cst_30 {dimension_numbers = #tpu.dot_dimension_numbers<[1], [0], [0], [1], [0, 0, 1, 1], [], []>} : vector<16x32xf32>, vector<32x4xf32>, vector<16x4xf32> -> vector<16x4xf32>
    %49 = vector.extract_strided_slice %48 {offsets = [0, 0], sizes = [8, 4], strides = [1, 1]} : vector<16x4xf32> to vector<8x4xf32>
    %cst_31 = arith.constant 1.000000e+00 : f32
    %50 = vector.broadcast %cst_31 : f32 to vector<8x4xf32>
    %51 = arith.divf %50, %49 : vector<8x4xf32>
    %52 = vector.extract_strided_slice %48 {offsets = [8, 0], sizes = [8, 4], strides = [1, 1]} : vector<16x4xf32> to vector<8x4xf32>
    %cst_32 = arith.constant 1.000000e+00 : f32
    %53 = vector.broadcast %cst_32 : f32 to vector<8x4xf32>
    %54 = arith.divf %53, %52 : vector<8x4xf32>
    %55 = tpu.concatenate %54, %51 in 0 : vector<8x4xf32>, vector<8x4xf32> -> vector<16x4xf32>
    %cst_33 = arith.constant dense<0.000000e+00> : vector<16x32xf32>
    %56 = tpu.matmul %55, %29, %cst_33 {dimension_numbers = #tpu.dot_dimension_numbers<[1], [0], [0], [1], [0, 0, 1, 1], [], []>} : vector<16x4xf32>, vector<4x32xf32>, vector<16x32xf32> -> vector<16x32xf32>
    %57 = vector.extract_strided_slice %56 {offsets = [0, 0], sizes = [8, 32], strides = [1, 1]} : vector<16x32xf32> to vector<8x32xf32>
    %58 = vector.extract_strided_slice %56 {offsets = [8, 0], sizes = [8, 32], strides = [1, 1]} : vector<16x32xf32> to vector<8x32xf32>
    %59 = arith.mulf %22, %57 : vector<8x32xf32>
    %cst_34 = arith.constant dense<0.000000e+00> : vector<32xf32>
    %60 = vector.multi_reduction <add>, %59, %cst_34 [0] : vector<8x32xf32> to vector<32xf32>
    %61 = vector.shape_cast %60 : vector<32xf32> to vector<1x32xf32>
    %62 = arith.mulf %12, %58 : vector<8x32xf32>
    %cst_35 = arith.constant dense<0.000000e+00> : vector<32xf32>
    %63 = vector.multi_reduction <add>, %62, %cst_35 [0] : vector<8x32xf32> to vector<32xf32>
    %64 = vector.shape_cast %63 : vector<32xf32> to vector<1x32xf32>
    %cst_36 = arith.constant 9.99999997E-7 : f32
    %65 = vector.broadcast %cst_36 : f32 to vector<1x32xf32>
    %66 = arith.addf %61, %65 : vector<1x32xf32>
    %67 = vector.broadcast %66 : vector<1x32xf32> to vector<8x32xf32>
    %68 = arith.mulf %32, %67 : vector<8x32xf32>
    %cst_37 = arith.constant 9.99999997E-7 : f32
    %69 = vector.broadcast %cst_37 : f32 to vector<1x32xf32>
    %70 = arith.addf %64, %69 : vector<1x32xf32>
    %71 = vector.broadcast %70 : vector<1x32xf32> to vector<8x32xf32>
    %72 = arith.mulf %34, %71 : vector<8x32xf32>
    %73 = tpu.concatenate %68, %72 in 0 : vector<8x32xf32>, vector<8x32xf32> -> vector<16x32xf32>
    %cst_38 = arith.constant dense<0.000000e+00> : vector<16x4xf32>
    %74 = tpu.matmul %73, %28, %cst_38 {dimension_numbers = #tpu.dot_dimension_numbers<[1], [0], [0], [1], [0, 0, 1, 1], [], []>} : vector<16x32xf32>, vector<32x4xf32>, vector<16x4xf32> -> vector<16x4xf32>
    %75 = vector.extract_strided_slice %74 {offsets = [0, 0], sizes = [8, 4], strides = [1, 1]} : vector<16x4xf32> to vector<8x4xf32>
    %76 = vector.extract_strided_slice %74 {offsets = [8, 0], sizes = [8, 4], strides = [1, 1]} : vector<16x4xf32> to vector<8x4xf32>
    %cst_39 = arith.constant -1.000000e+00 : f32
    %cst_40 = arith.constant 1.000000e+00 : f32
    %77 = vector.broadcast %cst_39 : f32 to vector<8x4xf32>
    %78 = arith.maximumf %77, %76 : vector<8x4xf32>
    %79 = vector.broadcast %cst_40 : f32 to vector<8x4xf32>
    %80 = arith.minimumf %79, %78 : vector<8x4xf32>
    %81 = arith.negf %75 : vector<8x4xf32>
    %82 = math.exp %81 : vector<8x4xf32>
    %cst_41 = arith.constant 1.000000e+00 : f32
    %83 = vector.broadcast %cst_41 : f32 to vector<8x4xf32>
    %84 = arith.addf %83, %82 : vector<8x4xf32>
    %85 = arith.divf %83, %84 : vector<8x4xf32>
    %cst_42 = arith.constant dense<0xFF800000> : vector<4xf32>
    %86 = vector.multi_reduction <maximumf>, %80, %cst_42 [0] : vector<8x4xf32> to vector<4xf32>
    %87 = vector.shape_cast %86 : vector<4xf32> to vector<1x4xf32>
    %88 = vector.broadcast %87 : vector<1x4xf32> to vector<8x4xf32>
    %89 = arith.subf %80, %88 : vector<8x4xf32>
    %90 = math.exp %89 : vector<8x4xf32>
    %cst_43 = arith.constant dense<0.000000e+00> : vector<4xf32>
    %91 = vector.multi_reduction <add>, %90, %cst_43 [0] : vector<8x4xf32> to vector<4xf32>
    %92 = vector.shape_cast %91 : vector<4xf32> to vector<1x4xf32>
    %93 = tpu.reciprocal %92 {approx = true} : vector<1x4xf32> -> vector<1x4xf32>
    %94 = vector.broadcast %93 : vector<1x4xf32> to vector<8x4xf32>
    %95 = arith.mulf %90, %94 : vector<8x4xf32>
    %cst_44 = arith.constant 8.000000e+00 : f32
    %96 = vector.broadcast %cst_44 : f32 to vector<8x4xf32>
    %97 = arith.mulf %95, %96 : vector<8x4xf32>
    %98 = tpu.concatenate %97, %85 in 0 : vector<8x4xf32>, vector<8x4xf32> -> vector<16x4xf32>
    %cst_45 = arith.constant dense<0.000000e+00> : vector<16x32xf32>
    %99 = tpu.matmul %98, %29, %cst_45 {dimension_numbers = #tpu.dot_dimension_numbers<[1], [0], [0], [1], [0, 0, 1, 1], [], []>} : vector<16x4xf32>, vector<4x32xf32>, vector<16x32xf32> -> vector<16x32xf32>
    %100 = vector.extract_strided_slice %99 {offsets = [0, 0], sizes = [8, 32], strides = [1, 1]} : vector<16x32xf32> to vector<8x32xf32>
    %101 = vector.extract_strided_slice %99 {offsets = [8, 0], sizes = [8, 32], strides = [1, 1]} : vector<16x32xf32> to vector<8x32xf32>
    %102 = arith.mulf %27, %100 : vector<8x32xf32>
    %103 = arith.truncf %102 : vector<8x32xf32> to vector<8x32xbf16>
    %104 = arith.truncf %22 : vector<8x32xf32> to vector<8x32xbf16>
    %cst_46 = arith.constant dense<0.000000e+00> : vector<32x32xf32>
    %105 = tpu.matmul %104, %103, %cst_46 {dimension_numbers = #tpu.dot_dimension_numbers<[0], [0], [1], [1], [0, 1, 1, 1], [], []>} : vector<8x32xbf16>, vector<8x32xbf16>, vector<32x32xf32> -> vector<32x32xf32>
    %106 = arith.mulf %105, %30 : vector<32x32xf32>
    %107 = arith.mulf %12, %58 : vector<8x32xf32>
    %108 = arith.truncf %107 : vector<8x32xf32> to vector<8x32xbf16>
    %109 = arith.truncf %106 : vector<32x32xf32> to vector<32x32xbf16>
    %cst_47 = arith.constant dense<0.000000e+00> : vector<8x32xf32>
    %110 = tpu.matmul %108, %109, %cst_47 {dimension_numbers = #tpu.dot_dimension_numbers<[1], [0], [0], [1], [0, 0, 1, 1], [], []>} : vector<8x32xbf16>, vector<32x32xbf16>, vector<8x32xf32> -> vector<8x32xf32>
    %111 = arith.mulf %110, %101 : vector<8x32xf32>
    %112 = arith.truncf %111 : vector<8x32xf32> to vector<8x32xbf16>
    %c0_48 = arith.constant 0 : index
    %c0_49 = arith.constant 0 : index
    %113 = vector.load %arg11[%c0_48, %c0_49] : memref<32x32xbf16, #tpu.memory_space<vmem>>, vector<32x32xbf16>
    %cst_50 = arith.constant dense<0.000000e+00> : vector<8x32xf32>
    %114 = tpu.matmul %112, %113, %cst_50 {dimension_numbers = #tpu.dot_dimension_numbers<[1], [0], [0], [1], [0, 0, 1, 1], [], []>} : vector<8x32xbf16>, vector<32x32xbf16>, vector<8x32xf32> -> vector<8x32xf32>
    %c0_51 = arith.constant 0 : index
    %c0_52 = arith.constant 0 : index
    %115 = vector.load %arg12[%c0_51, %c0_52] : memref<1x32xf32, #tpu.memory_space<vmem>>, vector<1x32xf32>
    %116 = vector.broadcast %115 : vector<1x32xf32> to vector<8x32xf32>
    %117 = arith.addf %114, %116 : vector<8x32xf32>
    %118 = arith.addf %1, %117 : vector<8x32xf32>
    %cst_53 = arith.constant dense<0.000000e+00> : vector<8xf32>
    %119 = vector.multi_reduction <add>, %118, %cst_53 [1] : vector<8x32xf32> to vector<8xf32>
    %120 = vector.shape_cast %119 : vector<8xf32> to vector<8x1xf32>
    %cst_54 = arith.constant 3.200000e+01 : f32
    %121 = vector.broadcast %cst_54 : f32 to vector<8x1xf32>
    %122 = arith.divf %120, %121 : vector<8x1xf32>
    %123 = vector.broadcast %122 : vector<8x1xf32> to vector<8x32xf32>
    %124 = arith.subf %118, %123 : vector<8x32xf32>
    %125 = arith.mulf %124, %124 : vector<8x32xf32>
    %cst_55 = arith.constant dense<0.000000e+00> : vector<8xf32>
    %126 = vector.multi_reduction <add>, %125, %cst_55 [1] : vector<8x32xf32> to vector<8xf32>
    %127 = vector.shape_cast %126 : vector<8xf32> to vector<8x1xf32>
    %cst_56 = arith.constant 0.0322580636 : f32
    %128 = vector.broadcast %cst_56 : f32 to vector<8x1xf32>
    %129 = arith.mulf %127, %128 : vector<8x1xf32>
    %130 = math.sqrt %129 : vector<8x1xf32>
    %cst_57 = arith.constant 9.99999997E-7 : f32
    %131 = vector.broadcast %cst_57 : f32 to vector<8x1xf32>
    %132 = arith.addf %130, %131 : vector<8x1xf32>
    %133 = tpu.reciprocal %132 {approx = true} : vector<8x1xf32> -> vector<8x1xf32>
    %c0_58 = arith.constant 0 : index
    %c0_59 = arith.constant 0 : index
    %134 = vector.load %arg13[%c0_58, %c0_59] : memref<1x32xf32, #tpu.memory_space<vmem>>, vector<1x32xf32>
    %135 = vector.broadcast %134 : vector<1x32xf32> to vector<8x32xf32>
    %136 = arith.mulf %135, %124 : vector<8x32xf32>
    %137 = vector.broadcast %133 : vector<8x1xf32> to vector<8x32xf32>
    %138 = arith.mulf %136, %137 : vector<8x32xf32>
    %c0_60 = arith.constant 0 : index
    %c0_61 = arith.constant 0 : index
    %139 = vector.load %arg14[%c0_60, %c0_61] : memref<1x32xf32, #tpu.memory_space<vmem>>, vector<1x32xf32>
    %140 = vector.broadcast %139 : vector<1x32xf32> to vector<8x32xf32>
    %141 = arith.addf %138, %140 : vector<8x32xf32>
    %142 = arith.truncf %141 : vector<8x32xf32> to vector<8x32xbf16>
    %c0_62 = arith.constant 0 : index
    %c0_63 = arith.constant 0 : index
    %143 = vector.load %arg15[%c0_62, %c0_63] : memref<32x128xbf16, #tpu.memory_space<vmem>>, vector<32x128xbf16>
    %cst_64 = arith.constant dense<0.000000e+00> : vector<8x128xf32>
    %144 = tpu.matmul %142, %143, %cst_64 {dimension_numbers = #tpu.dot_dimension_numbers<[1], [0], [0], [1], [0, 0, 1, 1], [], []>} : vector<8x32xbf16>, vector<32x128xbf16>, vector<8x128xf32> -> vector<8x128xf32>
    %c0_65 = arith.constant 0 : index
    %c0_66 = arith.constant 0 : index
    %145 = vector.load %arg16[%c0_65, %c0_66] : memref<1x128xf32, #tpu.memory_space<vmem>>, vector<1x128xf32>
    %146 = vector.broadcast %145 : vector<1x128xf32> to vector<8x128xf32>
    %147 = arith.addf %144, %146 : vector<8x128xf32>
    %cst_67 = arith.constant 0.000000e+00 : f32
    %148 = vector.broadcast %cst_67 : f32 to vector<8x128xf32>
    %149 = arith.maximumf %147, %148 : vector<8x128xf32>
    %150 = arith.truncf %149 : vector<8x128xf32> to vector<8x128xbf16>
    %c0_68 = arith.constant 0 : index
    %c0_69 = arith.constant 0 : index
    %151 = vector.load %arg17[%c0_68, %c0_69] : memref<128x32xbf16, #tpu.memory_space<vmem>>, vector<128x32xbf16>
    %cst_70 = arith.constant dense<0.000000e+00> : vector<8x32xf32>
    %152 = tpu.matmul %150, %151, %cst_70 {dimension_numbers = #tpu.dot_dimension_numbers<[1], [0], [0], [1], [0, 0, 1, 1], [], []>} : vector<8x128xbf16>, vector<128x32xbf16>, vector<8x32xf32> -> vector<8x32xf32>
    %c0_71 = arith.constant 0 : index
    %c0_72 = arith.constant 0 : index
    %153 = vector.load %arg18[%c0_71, %c0_72] : memref<1x32xf32, #tpu.memory_space<vmem>>, vector<1x32xf32>
    %154 = vector.broadcast %153 : vector<1x32xf32> to vector<8x32xf32>
    %155 = arith.addf %152, %154 : vector<8x32xf32>
    %156 = arith.addf %118, %155 : vector<8x32xf32>
    %c0_73 = arith.constant 0 : index
    %c0_74 = arith.constant 0 : index
    %c0_75 = arith.constant 0 : index
    %157 = vector.load %arg19[%c0_73, %c0_74, %c0_75] : memref<1x8x32xf32, #tpu.memory_space<vmem>>, vector<1x8x32xf32>
    %158 = vector.shape_cast %157 : vector<1x8x32xf32> to vector<8x32xf32>
    %159 = vector.shape_cast %156 : vector<8x32xf32> to vector<1x8x32xf32>
    tpu.vector_store %arg19[%c0_73, %c0_74, %c0_75], %159 {strides = array<i32>} : memref<1x8x32xf32, #tpu.memory_space<vmem>>, vector<1x8x32xf32>,
    return
  }
  func.func @transform_0(%arg0: i32) -> (i32, i32, i32) {
    %c0_i32 = arith.constant 0 : i32
    %c0_i32_0 = arith.constant 0 : i32
    %c0_i32_1 = arith.constant 0 : i32
    return %arg0, %c0_i32, %c0_i32_0 : i32, i32, i32
  }
  func.func @transform_1(%arg0: i32) -> (i32, i32) {
    %c0_i32 = arith.constant 0 : i32
    %c0_i32_0 = arith.constant 0 : i32
    %c0_i32_1 = arith.constant 0 : i32
    return %c0_i32, %c0_i32_0 : i32, i32
  }
  func.func @transform_2(%arg0: i32) -> (i32, i32) {
    %c0_i32 = arith.constant 0 : i32
    %c0_i32_0 = arith.constant 0 : i32
    %c0_i32_1 = arith.constant 0 : i32
    return %c0_i32, %c0_i32_0 : i32, i32
  }
  func.func @transform_3(%arg0: i32) -> (i32, i32) {
    %c0_i32 = arith.constant 0 : i32
    %c0_i32_0 = arith.constant 0 : i32
    %c0_i32_1 = arith.constant 0 : i32
    return %c0_i32, %c0_i32_0 : i32, i32
  }
  func.func @transform_4(%arg0: i32) -> (i32, i32) {
    %c0_i32 = arith.constant 0 : i32
    %c0_i32_0 = arith.constant 0 : i32
    %c0_i32_1 = arith.constant 0 : i32
    return %c0_i32, %c0_i32_0 : i32, i32
  }
  func.func @transform_5(%arg0: i32) -> (i32, i32) {
    %c0_i32 = arith.constant 0 : i32
    %c0_i32_0 = arith.constant 0 : i32
    %c0_i32_1 = arith.constant 0 : i32
    return %c0_i32, %c0_i32_0 : i32, i32
  }
  func.func @transform_6(%arg0: i32) -> (i32, i32) {
    %c0_i32 = arith.constant 0 : i32
    %c0_i32_0 = arith.constant 0 : i32
    %c0_i32_1 = arith.constant 0 : i32
    return %c0_i32, %c0_i32_0 : i32, i32
  }
  func.func @transform_7(%arg0: i32) -> (i32, i32) {
    %c0_i32 = arith.constant 0 : i32
    %c0_i32_0 = arith.constant 0 : i32
    %c0_i32_1 = arith.constant 0 : i32
    return %c0_i32, %c0_i32_0 : i32, i32
  }
  func.func @transform_8(%arg0: i32) -> (i32, i32) {
    %c0_i32 = arith.constant 0 : i32
    %c0_i32_0 = arith.constant 0 : i32
    %c0_i32_1 = arith.constant 0 : i32
    return %c0_i32, %c0_i32_0 : i32, i32
  }
  func.func @transform_9(%arg0: i32) -> (i32, i32) {
    %c0_i32 = arith.constant 0 : i32
    %c0_i32_0 = arith.constant 0 : i32
    %c0_i32_1 = arith.constant 0 : i32
    return %c0_i32, %c0_i32_0 : i32, i32
  }
  func.func @transform_10(%arg0: i32) -> (i32, i32) {
    %c0_i32 = arith.constant 0 : i32
    %c0_i32_0 = arith.constant 0 : i32
    %c0_i32_1 = arith.constant 0 : i32
    return %c0_i32, %c0_i32_0 : i32, i32
  }
  func.func @transform_11(%arg0: i32) -> (i32, i32) {
    %c0_i32 = arith.constant 0 : i32
    %c0_i32_0 = arith.constant 0 : i32
    %c0_i32_1 = arith.constant 0 : i32
    return %c0_i32, %c0_i32_0 : i32, i32
  }
  func.func @transform_12(%arg0: i32) -> (i32, i32) {
    %c0_i32 = arith.constant 0 : i32
    %c0_i32_0 = arith.constant 0 : i32
    %c0_i32_1 = arith.constant 0 : i32
    return %c0_i32, %c0_i32_0 : i32, i32
  }
  func.func @transform_13(%arg0: i32) -> (i32, i32) {
    %c0_i32 = arith.constant 0 : i32
    %c0_i32_0 = arith.constant 0 : i32
    %c0_i32_1 = arith.constant 0 : i32
    return %c0_i32, %c0_i32_0 : i32, i32
  }
  func.func @transform_14(%arg0: i32) -> (i32, i32) {
    %c0_i32 = arith.constant 0 : i32
    %c0_i32_0 = arith.constant 0 : i32
    %c0_i32_1 = arith.constant 0 : i32
    return %c0_i32, %c0_i32_0 : i32, i32
  }
  func.func @transform_15(%arg0: i32) -> (i32, i32) {
    %c0_i32 = arith.constant 0 : i32
    %c0_i32_0 = arith.constant 0 : i32
    %c0_i32_1 = arith.constant 0 : i32
    return %c0_i32, %c0_i32_0 : i32, i32
  }
  func.func @transform_16(%arg0: i32) -> (i32, i32) {
    %c0_i32 = arith.constant 0 : i32
    %c0_i32_0 = arith.constant 0 : i32
    %c0_i32_1 = arith.constant 0 : i32
    return %c0_i32, %c0_i32_0 : i32, i32
  }
  func.func @transform_17(%arg0: i32) -> (i32, i32) {
    %c0_i32 = arith.constant 0 : i32
    %c0_i32_0 = arith.constant 0 : i32
    %c0_i32_1 = arith.constant 0 : i32
    return %c0_i32, %c0_i32_0 : i32, i32
  }
  func.func @transform_18(%arg0: i32) -> (i32, i32, i32) {
    %c0_i32 = arith.constant 0 : i32
    %c0_i32_0 = arith.constant 0 : i32
    %c0_i32_1 = arith.constant 0 : i32
    return %arg0, %c0_i32, %c0_i32_0 : i32, i32, i32
  }
}

</mosaic_0001>

<llo_original>
// kernel: tpu_custom_call.1
$region0: #{tpu_custom_call.1}
  #allocation0 [shape = 'u32[]', space=smem, size = 0x4, offset = 0x4, fixed_abs, tag = 'smem constant byte address 0x4 - core index']
  #allocation1 [shape = 'u32[144,128]{1,0:T(1,128)}', space=vmem, size = 0x12000, scoped, tag = 'internal scratch']
  %s0 = inlined_call_operand.vmem [shape: f32[2,8,32], index: 0, kind: input, shape index: {}]
  %s1 = inlined_call_operand.vmem [shape: f32[32,4], index: 1, kind: input, shape index: {}]
  %s2 = inlined_call_operand.hbm [shape: f32[4,32], index: 2, kind: input, shape index: {}]
  %s3 = inlined_call_operand.vmem [shape: f32[32,32], index: 3, kind: input, shape index: {}]
  %s4 = inlined_call_operand.vmem [shape: bf16[32,32], index: 4, kind: input, shape index: {}]
  %s5 = inlined_call_operand.vmem [shape: f32[1,32], index: 5, kind: input, shape index: {}]
  %s6 = inlined_call_operand.vmem [shape: bf16[32,32], index: 6, kind: input, shape index: {}]
  %s7 = inlined_call_operand.vmem [shape: f32[1,32], index: 7, kind: input, shape index: {}]
  %s8 = inlined_call_operand.vmem [shape: bf16[32,32], index: 8, kind: input, shape index: {}]
  %s9 = inlined_call_operand.vmem [shape: f32[1,32], index: 9, kind: input, shape index: {}]
  %s10 = inlined_call_operand.vmem [shape: bf16[32,32], index: 10, kind: input, shape index: {}]
  %s11 = inlined_call_operand.vmem [shape: f32[1,32], index: 11, kind: input, shape index: {}]
  %s12 = inlined_call_operand.vmem [shape: f32[1,32], index: 12, kind: input, shape index: {}]
  %s13 = inlined_call_operand.vmem [shape: f32[1,32], index: 13, kind: input, shape index: {}]
  %s14 = inlined_call_operand.vmem [shape: bf16[32,128], index: 14, kind: input, shape index: {}]
  %s15 = inlined_call_operand.vmem [shape: f32[1,128], index: 15, kind: input, shape index: {}]
  %s16 = inlined_call_operand.vmem [shape: bf16[128,32], index: 16, kind: input, shape index: {}]
  %s17 = inlined_call_operand.vmem [shape: f32[1,32], index: 17, kind: input, shape index: {}]
  %s18 = inlined_call_operand.hbm [shape: f32[2,8,32], index: 18, kind: output, shape index: {}]
  %s19 = sld [smem:[#allocation0]]
  $region109: #{tpu_custom_call.1} parent=0
    _
  %s21 = ssub.s32 1, %s19
  %s22 = scalar_select 0, %s21, %s19
  $region1: #{tpu_custom_call.1} parent=0
    #allocation2 [shape = 'u8[2048]{0}', space=vmem, size = 0x800, scoped, tag = 'input window, operand 2, single buffered']
    #allocation3 [shape = 's32[2]{0}', space=sflag, size = 0x8, scoped, tag = 'scoped memory for tpu_custom_call.1']
    #allocation4 [shape = 's32[2]{0}', space=sflag, size = 0x8, scoped, tag = 'scoped memory for tpu_custom_call.1']
    #allocation5 [shape = 'u8[8192]{0}', space=vmem, size = 0x2000, scoped, tag = 'output window, operand 0']
    %23 = vsyncpa [#allocation3], 0
    %24 = vsyncpa [#allocation4], 0
    %s25 = scalar_lea.sflag [#allocation4], 1
    %26 = vsyncpa %s25, 0
    loop: start=0, step=1, limit=4
    $region2: #{tpu_custom_call.1} parent=1 // loop_pre_header
      _
    $region3: #{tpu_custom_call.1} parent=1 // loop_header
      %s28 = sphi 0, %s32
      %p29 = scmp.ge.s32.totalorder %s28, 4
      %s38 = sphi 0, %s40
      %s41 = sphi 0, %s38
      %s42 = sphi 0, %s41
      %s58 = sphi 0, %s42
      %s62 = sphi 0, %s62
      %s64 = sphi 0, %s62
      %s65 = sphi 0, %s64
      %s79 = sphi 0, %s65
      %s83 = sphi 0, %s83
      %s85 = sphi 0, %s83
      %s86 = sphi 0, %s85
      %s100 = sphi 0, %s86
      %s104 = sphi 0, %s104
      %s106 = sphi 0, %s104
      %s107 = sphi 0, %s106
      %s121 = sphi 0, %s107
      %s125 = sphi 0, %s125
      %s127 = sphi 0, %s125
      %s128 = sphi 0, %s127
      %s142 = sphi 0, %s128
      %s146 = sphi 0, %s146
      %s148 = sphi 0, %s146
      %s149 = sphi 0, %s148
      %s163 = sphi 0, %s149
      %s167 = sphi 0, %s167
      %s169 = sphi 0, %s167
      %s170 = sphi 0, %s169
      %s184 = sphi 0, %s170
      %s188 = sphi 0, %s188
      %s190 = sphi 0, %s188
      %s191 = sphi 0, %s190
      %s205 = sphi 0, %s191
      %s209 = sphi 0, %s209
      %s211 = sphi 0, %s209
      %s212 = sphi 0, %s211
      %s226 = sphi 0, %s212
      %s230 = sphi 0, %s230
      %s232 = sphi 0, %s230
      %s233 = sphi 0, %s232
      %s247 = sphi 0, %s233
      %s251 = sphi 0, %s251
      %s253 = sphi 0, %s251
      %s254 = sphi 0, %s253
      %s268 = sphi 0, %s254
      %s272 = sphi 0, %s272
      %s274 = sphi 0, %s272
      %s275 = sphi 0, %s274
      %s289 = sphi 0, %s275
      %s293 = sphi 0, %s293
      %s295 = sphi 0, %s293
      %s296 = sphi 0, %s295
      %s310 = sphi 0, %s296
      %s314 = sphi 0, %s314
      %s316 = sphi 0, %s314
      %s317 = sphi 0, %s316
      %s331 = sphi 0, %s317
      %s335 = sphi 0, %s335
      %s337 = sphi 0, %s335
      %s338 = sphi 0, %s337
      %s352 = sphi 0, %s338
      %s356 = sphi 0, %s356
      %s358 = sphi 0, %s356
      %s359 = sphi 0, %s358
      %s373 = sphi 0, %s359
      %s377 = sphi 0, %s377
      %s379 = sphi 0, %s377
      %s380 = sphi 0, %s379
      %s394 = sphi 0, %s380
      %s398 = sphi 0, %s398
      %s400 = sphi 0, %s398
      %s401 = sphi 0, %s400
      %s415 = sphi 0, %s401
      %s421 = sphi 0, %s423
      %s424 = sphi 0, %s421
      %s425 = sphi 0, %s424
      %s441 = sphi 0, %s425
    $region4: #{tpu_custom_call.1} parent=1 // loop_header_branch
      %31 = sbr.rel (%p29) target = $region8
    $region5: #{tpu_custom_call.1} parent=1 // loop_body
      %s33 = ssub.s32 %s28, 1
      %s34 = ssub.s32 %s28, 2
      %s35 = sadd.s32 %s28, 1
      %s36 = ssub.s32 %s28, %s35
      %p37 = scmp.eq.s32.totalorder %s36, 0
      %s39 = sadd.s32 %s38, 1
      %s40 = scalar_select %p37, %s38, %s39
      %p43 = pneg %p37
      %p44 = scmp.eq.s32.totalorder %s28, 1
      %p45 = por %p43, %p44
      %p46 = scmp.ne.s32.totalorder %s38, %s41
      %p47 = scmp.eq.s32.totalorder %s28, 0
      %p48 = por %p46, %p47
      %p49 = scmp.ne.s32.totalorder %s38, %s41
      %p50 = scmp.eq.s32.totalorder %s33, 1
      %p51 = por %p49, %p50
      %p52 = scmp.ne.s32.totalorder %s41, %s42
      %p53 = scmp.eq.s32.totalorder %s33, 0
      %p54 = por %p52, %p53
      %p55 = scmp.ne.s32.totalorder %s41, %s42
      %p56 = scmp.eq.s32.totalorder %s34, 1
      %p57 = por %p55, %p56
      %p59 = scmp.ne.s32.totalorder %s42, %s58
      %p60 = scmp.eq.s32.totalorder %s34, 0
      %p61 = por %p59, %p60
      %s63 = sadd.s32 %s62, 1
      %p66 = scmp.eq.s32.totalorder %s28, 1
      %p67 = scmp.ne.s32.totalorder %s62, %s64
      %p68 = scmp.eq.s32.totalorder %s28, 0
      %p69 = por %p67, %p68
      %p70 = scmp.ne.s32.totalorder %s62, %s64
      %p71 = scmp.eq.s32.totalorder %s33, 1
      %p72 = por %p70, %p71
      %p73 = scmp.ne.s32.totalorder %s64, %s65
      %p74 = scmp.eq.s32.totalorder %s33, 0
      %p75 = por %p73, %p74
      %p76 = scmp.ne.s32.totalorder %s64, %s65
      %p77 = scmp.eq.s32.totalorder %s34, 1
      %p78 = por %p76, %p77
      %p80 = scmp.ne.s32.totalorder %s65, %s79
      %p81 = scmp.eq.s32.totalorder %s34, 0
      %p82 = por %p80, %p81
      %s84 = sadd.s32 %s83, 1
      %p87 = scmp.eq.s32.totalorder %s28, 1
      %p88 = scmp.ne.s32.totalorder %s83, %s85
      %p89 = scmp.eq.s32.totalorder %s28, 0
      %p90 = por %p88, %p89
      %p91 = scmp.ne.s32.totalorder %s83, %s85
      %p92 = scmp.eq.s32.totalorder %s33, 1
      %p93 = por %p91, %p92
      %p94 = scmp.ne.s32.totalorder %s85, %s86
      %p95 = scmp.eq.s32.totalorder %s33, 0
      %p96 = por %p94, %p95
      %p97 = scmp.ne.s32.totalorder %s85, %s86
      %p98 = scmp.eq.s32.totalorder %s34, 1
      %p99 = por %p97, %p98
      %p101 = scmp.ne.s32.totalorder %s86, %s100
      %p102 = scmp.eq.s32.totalorder %s34, 0
      %p103 = por %p101, %p102
      %s105 = sadd.s32 %s104, 1
      %p108 = scmp.eq.s32.totalorder %s28, 1
      %p109 = scmp.ne.s32.totalorder %s104, %s106
      %p110 = scmp.eq.s32.totalorder %s28, 0
      %p111 = por %p109, %p110
      %p112 = scmp.ne.s32.totalorder %s104, %s106
      %p113 = scmp.eq.s32.totalorder %s33, 1
      %p114 = por %p112, %p113
      %p115 = scmp.ne.s32.totalorder %s106, %s107
      %p116 = scmp.eq.s32.totalorder %s33, 0
      %p117 = por %p115, %p116
      %p118 = scmp.ne.s32.totalorder %s106, %s107
      %p119 = scmp.eq.s32.totalorder %s34, 1
      %p120 = por %p118, %p119
      %p122 = scmp.ne.s32.totalorder %s107, %s121
      %p123 = scmp.eq.s32.totalorder %s34, 0
      %p124 = por %p122, %p123
      %s126 = sadd.s32 %s125, 1
      %p129 = scmp.eq.s32.totalorder %s28, 1
      %p130 = scmp.ne.s32.totalorder %s125, %s127
      %p131 = scmp.eq.s32.totalorder %s28, 0
      %p132 = por %p130, %p131
      %p133 = scmp.ne.s32.totalorder %s125, %s127
      %p134 = scmp.eq.s32.totalorder %s33, 1
      %p135 = por %p133, %p134
      %p136 = scmp.ne.s32.totalorder %s127, %s128
      %p137 = scmp.eq.s32.totalorder %s33, 0
      %p138 = por %p136, %p137
      %p139 = scmp.ne.s32.totalorder %s127, %s128
      %p140 = scmp.eq.s32.totalorder %s34, 1
      %p141 = por %p139, %p140
      %p143 = scmp.ne.s32.totalorder %s128, %s142
      %p144 = scmp.eq.s32.totalorder %s34, 0
      %p145 = por %p143, %p144
      %s147 = sadd.s32 %s146, 1
      %p150 = scmp.eq.s32.totalorder %s28, 1
      %p151 = scmp.ne.s32.totalorder %s146, %s148
      %p152 = scmp.eq.s32.totalorder %s28, 0
      %p153 = por %p151, %p152
      %p154 = scmp.ne.s32.totalorder %s146, %s148
      %p155 = scmp.eq.s32.totalorder %s33, 1
      %p156 = por %p154, %p155
      %p157 = scmp.ne.s32.totalorder %s148, %s149
      %p158 = scmp.eq.s32.totalorder %s33, 0
      %p159 = por %p157, %p158
      %p160 = scmp.ne.s32.totalorder %s148, %s149
      %p161 = scmp.eq.s32.totalorder %s34, 1
      %p162 = por %p160, %p161
      %p164 = scmp.ne.s32.totalorder %s149, %s163
      %p165 = scmp.eq.s32.totalorder %s34, 0
      %p166 = por %p164, %p165
      %s168 = sadd.s32 %s167, 1
      %p171 = scmp.eq.s32.totalorder %s28, 1
      %p172 = scmp.ne.s32.totalorder %s167, %s169
      %p173 = scmp.eq.s32.totalorder %s28, 0
      %p174 = por %p172, %p173
      %p175 = scmp.ne.s32.totalorder %s167, %s169
      %p176 = scmp.eq.s32.totalorder %s33, 1
      %p177 = por %p175, %p176
      %p178 = scmp.ne.s32.totalorder %s169, %s170
      %p179 = scmp.eq.s32.totalorder %s33, 0
      %p180 = por %p178, %p179
      %p181 = scmp.ne.s32.totalorder %s169, %s170
      %p182 = scmp.eq.s32.totalorder %s34, 1
      %p183 = por %p181, %p182
      %p185 = scmp.ne.s32.totalorder %s170, %s184
      %p186 = scmp.eq.s32.totalorder %s34, 0
      %p187 = por %p185, %p186
      %s189 = sadd.s32 %s188, 1
      %p192 = scmp.eq.s32.totalorder %s28, 1
      %p193 = scmp.ne.s32.totalorder %s188, %s190
      %p194 = scmp.eq.s32.totalorder %s28, 0
      %p195 = por %p193, %p194
      %p196 = scmp.ne.s32.totalorder %s188, %s190
      %p197 = scmp.eq.s32.totalorder %s33, 1
      %p198 = por %p196, %p197
      %p199 = scmp.ne.s32.totalorder %s190, %s191
      %p200 = scmp.eq.s32.totalorder %s33, 0
      %p201 = por %p199, %p200
      %p202 = scmp.ne.s32.totalorder %s190, %s191
      %p203 = scmp.eq.s32.totalorder %s34, 1
      %p204 = por %p202, %p203
      %p206 = scmp.ne.s32.totalorder %s191, %s205
      %p207 = scmp.eq.s32.totalorder %s34, 0
      %p208 = por %p206, %p207
      %s210 = sadd.s32 %s209, 1
      %p213 = scmp.eq.s32.totalorder %s28, 1
      %p214 = scmp.ne.s32.totalorder %s209, %s211
      %p215 = scmp.eq.s32.totalorder %s28, 0
      %p216 = por %p214, %p215
      %p217 = scmp.ne.s32.totalorder %s209, %s211
      %p218 = scmp.eq.s32.totalorder %s33, 1
      %p219 = por %p217, %p218
      %p220 = scmp.ne.s32.totalorder %s211, %s212
      %p221 = scmp.eq.s32.totalorder %s33, 0
      %p222 = por %p220, %p221
      %p223 = scmp.ne.s32.totalorder %s211, %s212
      %p224 = scmp.eq.s32.totalorder %s34, 1
      %p225 = por %p223, %p224
      %p227 = scmp.ne.s32.totalorder %s212, %s226
      %p228 = scmp.eq.s32.totalorder %s34, 0
      %p229 = por %p227, %p228
      %s231 = sadd.s32 %s230, 1
      %p234 = scmp.eq.s32.totalorder %s28, 1
      %p235 = scmp.ne.s32.totalorder %s230, %s232
      %p236 = scmp.eq.s32.totalorder %s28, 0
      %p237 = por %p235, %p236
      %p238 = scmp.ne.s32.totalorder %s230, %s232
      %p239 = scmp.eq.s32.totalorder %s33, 1
      %p240 = por %p238, %p239
      %p241 = scmp.ne.s32.totalorder %s232, %s233
      %p242 = scmp.eq.s32.totalorder %s33, 0
      %p243 = por %p241, %p242
      %p244 = scmp.ne.s32.totalorder %s232, %s233
      %p245 = scmp.eq.s32.totalorder %s34, 1
      %p246 = por %p244, %p245
      %p248 = scmp.ne.s32.totalorder %s233, %s247
      %p249 = scmp.eq.s32.totalorder %s34, 0
      %p250 = por %p248, %p249
      %s252 = sadd.s32 %s251, 1
      %p255 = scmp.eq.s32.totalorder %s28, 1
      %p256 = scmp.ne.s32.totalorder %s251, %s253
      %p257 = scmp.eq.s32.totalorder %s28, 0
      %p258 = por %p256, %p257
      %p259 = scmp.ne.s32.totalorder %s251, %s253
      %p260 = scmp.eq.s32.totalorder %s33, 1
      %p261 = por %p259, %p260
      %p262 = scmp.ne.s32.totalorder %s253, %s254
      %p263 = scmp.eq.s32.totalorder %s33, 0
      %p264 = por %p262, %p263
      %p265 = scmp.ne.s32.totalorder %s253, %s254
      %p266 = scmp.eq.s32.totalorder %s34, 1
      %p267 = por %p265, %p266
      %p269 = scmp.ne.s32.totalorder %s254, %s268
      %p270 = scmp.eq.s32.totalorder %s34, 0
      %p271 = por %p269, %p270
      %s273 = sadd.s32 %s272, 1
      %p276 = scmp.eq.s32.totalorder %s28, 1
      %p277 = scmp.ne.s32.totalorder %s272, %s274
      %p278 = scmp.eq.s32.totalorder %s28, 0
      %p279 = por %p277, %p278
      %p280 = scmp.ne.s32.totalorder %s272, %s274
      %p281 = scmp.eq.s32.totalorder %s33, 1
      %p282 = por %p280, %p281
      %p283 = scmp.ne.s32.totalorder %s274, %s275
      %p284 = scmp.eq.s32.totalorder %s33, 0
      %p285 = por %p283, %p284
      %p286 = scmp.ne.s32.totalorder %s274, %s275
      %p287 = scmp.eq.s32.totalorder %s34, 1
      %p288 = por %p286, %p287
      %p290 = scmp.ne.s32.totalorder %s275, %s289
      %p291 = scmp.eq.s32.totalorder %s34, 0
      %p292 = por %p290, %p291
      %s294 = sadd.s32 %s293, 1
      %p297 = scmp.eq.s32.totalorder %s28, 1
      %p298 = scmp.ne.s32.totalorder %s293, %s295
      %p299 = scmp.eq.s32.totalorder %s28, 0
      %p300 = por %p298, %p299
      %p301 = scmp.ne.s32.totalorder %s293, %s295
      %p302 = scmp.eq.s32.totalorder %s33, 1
      %p303 = por %p301, %p302
      %p304 = scmp.ne.s32.totalorder %s295, %s296
      %p305 = scmp.eq.s32.totalorder %s33, 0
      %p306 = por %p304, %p305
      %p307 = scmp.ne.s32.totalorder %s295, %s296
      %p308 = scmp.eq.s32.totalorder %s34, 1
      %p309 = por %p307, %p308
      %p311 = scmp.ne.s32.totalorder %s296, %s310
      %p312 = scmp.eq.s32.totalorder %s34, 0
      %p313 = por %p311, %p312
      %s315 = sadd.s32 %s314, 1
      %p318 = scmp.eq.s32.totalorder %s28, 1
      %p319 = scmp.ne.s32.totalorder %s314, %s316
      %p320 = scmp.eq.s32.totalorder %s28, 0
      %p321 = por %p319, %p320
      %p322 = scmp.ne.s32.totalorder %s314, %s316
      %p323 = scmp.eq.s32.totalorder %s33, 1
      %p324 = por %p322, %p323
      %p325 = scmp.ne.s32.totalorder %s316, %s317
      %p326 = scmp.eq.s32.totalorder %s33, 0
      %p327 = por %p325, %p326
      %p328 = scmp.ne.s32.totalorder %s316, %s317
      %p329 = scmp.eq.s32.totalorder %s34, 1
      %p330 = por %p328, %p329
      %p332 = scmp.ne.s32.totalorder %s317, %s331
      %p333 = scmp.eq.s32.totalorder %s34, 0
      %p334 = por %p332, %p333
      %s336 = sadd.s32 %s335, 1
      %p339 = scmp.eq.s32.totalorder %s28, 1
      %p340 = scmp.ne.s32.totalorder %s335, %s337
      %p341 = scmp.eq.s32.totalorder %s28, 0
      %p342 = por %p340, %p341
      %p343 = scmp.ne.s32.totalorder %s335, %s337
      %p344 = scmp.eq.s32.totalorder %s33, 1
      %p345 = por %p343, %p344
      %p346 = scmp.ne.s32.totalorder %s337, %s338
      %p347 = scmp.eq.s32.totalorder %s33, 0
      %p348 = por %p346, %p347
      %p349 = scmp.ne.s32.totalorder %s337, %s338
      %p350 = scmp.eq.s32.totalorder %s34, 1
      %p351 = por %p349, %p350
      %p353 = scmp.ne.s32.totalorder %s338, %s352
      %p354 = scmp.eq.s32.totalorder %s34, 0
      %p355 = por %p353, %p354
      %s357 = sadd.s32 %s356, 1
      %p360 = scmp.eq.s32.totalorder %s28, 1
      %p361 = scmp.ne.s32.totalorder %s356, %s358
      %p362 = scmp.eq.s32.totalorder %s28, 0
      %p363 = por %p361, %p362
      %p364 = scmp.ne.s32.totalorder %s356, %s358
      %p365 = scmp.eq.s32.totalorder %s33, 1
      %p366 = por %p364, %p365
      %p367 = scmp.ne.s32.totalorder %s358, %s359
      %p368 = scmp.eq.s32.totalorder %s33, 0
      %p369 = por %p367, %p368
      %p370 = scmp.ne.s32.totalorder %s358, %s359
      %p371 = scmp.eq.s32.totalorder %s34, 1
      %p372 = por %p370, %p371
      %p374 = scmp.ne.s32.totalorder %s359, %s373
      %p375 = scmp.eq.s32.totalorder %s34, 0
      %p376 = por %p374, %p375
      %s378 = sadd.s32 %s377, 1
      %p381 = scmp.eq.s32.totalorder %s28, 1
      %p382 = scmp.ne.s32.totalorder %s377, %s379
      %p383 = scmp.eq.s32.totalorder %s28, 0
      %p384 = por %p382, %p383
      %p385 = scmp.ne.s32.totalorder %s377, %s379
      %p386 = scmp.eq.s32.totalorder %s33, 1
      %p387 = por %p385, %p386
      %p388 = scmp.ne.s32.totalorder %s379, %s380
      %p389 = scmp.eq.s32.totalorder %s33, 0
      %p390 = por %p388, %p389
      %p391 = scmp.ne.s32.totalorder %s379, %s380
      %p392 = scmp.eq.s32.totalorder %s34, 1
      %p393 = por %p391, %p392
      %p395 = scmp.ne.s32.totalorder %s380, %s394
      %p396 = scmp.eq.s32.totalorder %s34, 0
      %p397 = por %p395, %p396
      %s399 = sadd.s32 %s398, 1
      %p402 = scmp.eq.s32.totalorder %s28, 1
      %p403 = scmp.ne.s32.totalorder %s398, %s400
      %p404 = scmp.eq.s32.totalorder %s28, 0
      %p405 = por %p403, %p404
      %p406 = scmp.ne.s32.totalorder %s398, %s400
      %p407 = scmp.eq.s32.totalorder %s33, 1
      %p408 = por %p406, %p407
      %p409 = scmp.ne.s32.totalorder %s400, %s401
      %p410 = scmp.eq.s32.totalorder %s33, 0
      %p411 = por %p409, %p410
      %p412 = scmp.ne.s32.totalorder %s400, %s401
      %p413 = scmp.eq.s32.totalorder %s34, 1
      %p414 = por %p412, %p413
      %p416 = scmp.ne.s32.totalorder %s401, %s415
      %p417 = scmp.eq.s32.totalorder %s34, 0
      %p418 = por %p416, %p417
      %s419 = ssub.s32 %s28, %s35
      %p420 = scmp.eq.s32.totalorder %s419, 0
      %s422 = sadd.s32 %s421, 1
      %s423 = scalar_select %p420, %s421, %s422
      %p426 = pneg %p420
      %p427 = scmp.eq.s32.totalorder %s28, 1
      %p428 = por %p426, %p427
      %p429 = scmp.ne.s32.totalorder %s421, %s424
      %p430 = scmp.eq.s32.totalorder %s28, 0
      %p431 = por %p429, %p430
      %p432 = scmp.ne.s32.totalorder %s421, %s424
      %p433 = scmp.eq.s32.totalorder %s33, 1
      %p434 = por %p432, %p433
      %p435 = scmp.ne.s32.totalorder %s424, %s425
      %p436 = scmp.eq.s32.totalorder %s33, 0
      %p437 = por %p435, %p436
      %p438 = scmp.ne.s32.totalorder %s424, %s425
      %p439 = scmp.eq.s32.totalorder %s34, 1
      %p440 = por %p438, %p439
      %p442 = scmp.ne.s32.totalorder %s425, %s441
      %p443 = scmp.eq.s32.totalorder %s34, 0
      %p444 = por %p442, %p443
      %p445 = scmp.le.s32.totalorder 1, %s28
      %p446 = scmp.lt.s32.totalorder %s28, 3
      %p447 = pnand %p445, %p446
      %p448 = pneg %p447
      // Predicated region
      $region9: #{tpu_custom_call.1} parent=5 // pred_check
        _
      $region10: #{tpu_custom_call.1} parent=5 // pred_check_branch
        %450 = sbr.rel (%p447) target = $region12
      $region11: #{tpu_custom_call.1} parent=5 // pred_region
        %s451 = ssub.s32 %s28, 1
        // Predicated region
        $region13: #{tpu_custom_call.1} parent=11 // pred_check
          %p452 = pneg %p75
        $region14: #{tpu_custom_call.1} parent=11 // pred_check_branch
          %454 = sbr.rel (%p452) target = $region16
        $region15: #{tpu_custom_call.1} parent=11 // pred_region
          _
        $region16: #{tpu_custom_call.1} parent=11 // pred_fallthru
          _
        // Predicated region
        $region17: #{tpu_custom_call.1} parent=11 // pred_check
          %p455 = pneg %p96
        $region18: #{tpu_custom_call.1} parent=11 // pred_check_branch
          %457 = sbr.rel (%p455) target = $region20
        $region19: #{tpu_custom_call.1} parent=11 // pred_region
          %s459 = ssub.s32 64, 64
          %460 = vsyncadd [#allocation3], %s459
          %s462 = sshll.u32 [#allocation2], 4
          %s463 = int_to_ptr.vmem [resolvable:$true] %s462
          %465 = dma.hbm_to_vmem [thread:$0]  %s2, 64, %s463, [#allocation3]
        $region20: #{tpu_custom_call.1} parent=11 // pred_fallthru
          _
        // Predicated region
        $region21: #{tpu_custom_call.1} parent=11 // pred_check
          %p466 = pneg %p117
        $region22: #{tpu_custom_call.1} parent=11 // pred_check_branch
          %468 = sbr.rel (%p466) target = $region24
        $region23: #{tpu_custom_call.1} parent=11 // pred_region
          _
        $region24: #{tpu_custom_call.1} parent=11 // pred_fallthru
          _
        // Predicated region
        $region25: #{tpu_custom_call.1} parent=11 // pred_check
          %p469 = pneg %p138
        $region26: #{tpu_custom_call.1} parent=11 // pred_check_branch
          %471 = sbr.rel (%p469) target = $region28
        $region27: #{tpu_custom_call.1} parent=11 // pred_region
          _
        $region28: #{tpu_custom_call.1} parent=11 // pred_fallthru
          _
        // Predicated region
        $region29: #{tpu_custom_call.1} parent=11 // pred_check
          %p472 = pneg %p159
        $region30: #{tpu_custom_call.1} parent=11 // pred_check_branch
          %474 = sbr.rel (%p472) target = $region32
        $region31: #{tpu_custom_call.1} parent=11 // pred_region
          _
        $region32: #{tpu_custom_call.1} parent=11 // pred_fallthru
          _
        // Predicated region
        $region33: #{tpu_custom_call.1} parent=11 // pred_check
          %p475 = pneg %p180
        $region34: #{tpu_custom_call.1} parent=11 // pred_check_branch
          %477 = sbr.rel (%p475) target = $region36
        $region35: #{tpu_custom_call.1} parent=11 // pred_region
          _
        $region36: #{tpu_custom_call.1} parent=11 // pred_fallthru
          _
        // Predicated region
        $region37: #{tpu_custom_call.1} parent=11 // pred_check
          %p478 = pneg %p201
        $region38: #{tpu_custom_call.1} parent=11 // pred_check_branch
          %480 = sbr.rel (%p478) target = $region40
        $region39: #{tpu_custom_call.1} parent=11 // pred_region
          _
        $region40: #{tpu_custom_call.1} parent=11 // pred_fallthru
          _
        // Predicated region
        $region41: #{tpu_custom_call.1} parent=11 // pred_check
          %p481 = pneg %p222
        $region42: #{tpu_custom_call.1} parent=11 // pred_check_branch
          %483 = sbr.rel (%p481) target = $region44
        $region43: #{tpu_custom_call.1} parent=11 // pred_region
          _
        $region44: #{tpu_custom_call.1} parent=11 // pred_fallthru
          _
        // Predicated region
        $region45: #{tpu_custom_call.1} parent=11 // pred_check
          %p484 = pneg %p243
        $region46: #{tpu_custom_call.1} parent=11 // pred_check_branch
          %486 = sbr.rel (%p484) target = $region48
        $region47: #{tpu_custom_call.1} parent=11 // pred_region
          _
        $region48: #{tpu_custom_call.1} parent=11 // pred_fallthru
          _
        // Predicated region
        $region49: #{tpu_custom_call.1} parent=11 // pred_check
          %p487 = pneg %p264
        $region50: #{tpu_custom_call.1} parent=11 // pred_check_branch
          %489 = sbr.rel (%p487) target = $region52
        $region51: #{tpu_custom_call.1} parent=11 // pred_region
          _
        $region52: #{tpu_custom_call.1} parent=11 // pred_fallthru
          _
        // Predicated region
        $region53: #{tpu_custom_call.1} parent=11 // pred_check
          %p490 = pneg %p285
        $region54: #{tpu_custom_call.1} parent=11 // pred_check_branch
          %492 = sbr.rel (%p490) target = $region56
        $region55: #{tpu_custom_call.1} parent=11 // pred_region
          _
        $region56: #{tpu_custom_call.1} parent=11 // pred_fallthru
          _
        // Predicated region
        $region57: #{tpu_custom_call.1} parent=11 // pred_check
          %p493 = pneg %p306
        $region58: #{tpu_custom_call.1} parent=11 // pred_check_branch
          %495 = sbr.rel (%p493) target = $region60
        $region59: #{tpu_custom_call.1} parent=11 // pred_region
          _
        $region60: #{tpu_custom_call.1} parent=11 // pred_fallthru
          _
        // Predicated region
        $region61: #{tpu_custom_call.1} parent=11 // pred_check
          %p496 = pneg %p327
        $region62: #{tpu_custom_call.1} parent=11 // pred_check_branch
          %498 = sbr.rel (%p496) target = $region64
        $region63: #{tpu_custom_call.1} parent=11 // pred_region
          _
        $region64: #{tpu_custom_call.1} parent=11 // pred_fallthru
          _
        // Predicated region
        $region65: #{tpu_custom_call.1} parent=11 // pred_check
          %p499 = pneg %p348
        $region66: #{tpu_custom_call.1} parent=11 // pred_check_branch
          %501 = sbr.rel (%p499) target = $region68
        $region67: #{tpu_custom_call.1} parent=11 // pred_region
          _
        $region68: #{tpu_custom_call.1} parent=11 // pred_fallthru
          _
        // Predicated region
        $region69: #{tpu_custom_call.1} parent=11 // pred_check
          %p502 = pneg %p369
        $region70: #{tpu_custom_call.1} parent=11 // pred_check_branch
          %504 = sbr.rel (%p502) target = $region72
        $region71: #{tpu_custom_call.1} parent=11 // pred_region
          _
        $region72: #{tpu_custom_call.1} parent=11 // pred_fallthru
          _
        // Predicated region
        $region73: #{tpu_custom_call.1} parent=11 // pred_check
          %p505 = pneg %p390
        $region74: #{tpu_custom_call.1} parent=11 // pred_check_branch
          %507 = sbr.rel (%p505) target = $region76
        $region75: #{tpu_custom_call.1} parent=11 // pred_region
          _
        $region76: #{tpu_custom_call.1} parent=11 // pred_fallthru
          _
        // Predicated region
        $region77: #{tpu_custom_call.1} parent=11 // pred_check
          %p508 = pneg %p411
        $region78: #{tpu_custom_call.1} parent=11 // pred_check_branch
          %510 = sbr.rel (%p508) target = $region80
        $region79: #{tpu_custom_call.1} parent=11 // pred_region
          _
        $region80: #{tpu_custom_call.1} parent=11 // pred_fallthru
          _
      $region12: #{tpu_custom_call.1} parent=5 // pred_fallthru
        _
      %p511 = scmp.lt.s32.totalorder %s28, 2
      // Predicated region
      $region81: #{tpu_custom_call.1} parent=5 // pred_check
        %p512 = pneg %p511
      $region82: #{tpu_custom_call.1} parent=5 // pred_check_branch
        %514 = sbr.rel (%p512) target = $region84
      $region83: #{tpu_custom_call.1} parent=5 // pred_region
        // Predicated region
        $region85: #{tpu_custom_call.1} parent=83 // pred_check
          %p515 = pneg %p48
        $region86: #{tpu_custom_call.1} parent=83 // pred_check_branch
          %517 = sbr.rel (%p515) target = $region88
        $region87: #{tpu_custom_call.1} parent=83 // pred_region
          %p518 = scmp.lt.s32.totalorder %s28, 1
          %s519 = scalar_select %p518, %s28, 1
          %s520 = smul.addr %s519, 8
          %s521 = scalar_lea.vmem %s0, %s520
        $region88: #{tpu_custom_call.1} parent=83 // pred_fallthru
          _
      $region84: #{tpu_custom_call.1} parent=5 // pred_fallthru
        _
      %p522 = scmp.le.s32.totalorder 1, %s28
      %p523 = scmp.lt.s32.totalorder %s28, 3
      %p524 = pnand %p522, %p523
      %p525 = pneg %p524
      // Predicated region
      $region89: #{tpu_custom_call.1} parent=5 // pred_check
        _
      $region90: #{tpu_custom_call.1} parent=5 // pred_check_branch
        %527 = sbr.rel (%p524) target = $region92
      $region91: #{tpu_custom_call.1} parent=5 // pred_region
        %s528 = ssub.s32 %s28, 1
        // Predicated region
        $region93: #{tpu_custom_call.1} parent=91 // pred_check
          %p529 = pneg %p96
        $region94: #{tpu_custom_call.1} parent=91 // pred_check_branch
          %531 = sbr.rel (%p529) target = $region96
        $region95: #{tpu_custom_call.1} parent=91 // pred_region
          %532 = dma.done [#allocation3], 64
        $region96: #{tpu_custom_call.1} parent=91 // pred_fallthru
          _
        %p533 = scmp.lt.s32.totalorder %s33, 1
        %s534 = scalar_select %p533, %s33, 1
        %s535 = smul.addr %s534, 8
        %s536 = scalar_lea.vmem %s0, %s535
        %p537 = pneg %p54
        %p538 = pneg %p51
        %p539 = pneg %p75
        %p540 = pneg %p72
        %p541 = pneg %p96
        %p542 = pneg %p93
        %p543 = pneg %p117
        %p544 = pneg %p114
        %p545 = pneg %p138
        %p546 = pneg %p135
        %p547 = pneg %p159
        %p548 = pneg %p156
        %p549 = pneg %p180
        %p550 = pneg %p177
        %p551 = pneg %p201
        %p552 = pneg %p198
        %p553 = pneg %p222
        %p554 = pneg %p219
        %p555 = pneg %p243
        %p556 = pneg %p240
        %p557 = pneg %p264
        %p558 = pneg %p261
        %p559 = pneg %p285
        %p560 = pneg %p282
        %p561 = pneg %p306
        %p562 = pneg %p303
        %p563 = pneg %p327
        %p564 = pneg %p324
        %p565 = pneg %p348
        %p566 = pneg %p345
        %p567 = pneg %p369
        %p568 = pneg %p366
        %p569 = pneg %p390
        %p570 = pneg %p387
        %p571 = pneg %p411
        %p572 = pneg %p408
        %p573 = pneg %p437
        %p574 = pneg %p434
        %s575 = sand.u32 %s424, 1
        %s576 = scalar_lea.sflag [#allocation4], %s575
        %s577 = sand.u32 %s424, 1
        %s578 = smul.addr %s577, 8
        %s579 = scalar_lea.vmem [#allocation5], %s578
        %p580 = scmp.lt.s32.totalorder %s33, 1
        %s581 = scalar_select %p580, %s33, 1
        %s582 = smul.addr %s581, 8
        %s583 = scalar_lea.vmem %s0, %s582
        %v585 = vld [vmem:[%s583] sm:$0xff]
        %v586 = vpack.c.bf16 %v585, %v585
        %v587 = vld [vmem:[%s4] sm:$0xf]
        %v588 = vld [vmem:[%s4 + $0x4] sm:$0xf]
        %v589 = vld [vmem:[%s4 + $0x8] sm:$0xf]
        %v590 = vld [vmem:[%s4 + $0xc] sm:$0xf]
        %v591 = vld [vmem:[%s5] sm:$0x1]
        %v593 = vlaneseq
        %v594 = vshrl.u32 %v593, 7
        %v595 = vsub.s32 0, %v594
        %v596 = vrot.slane %v591, %v595
        %v602 = vunpack.c.l.b16 %v587
        %v603 = vunpack.c.l.b16 %v588
        %v604 = vunpack.c.l.b16 %v589
        %v605 = vunpack.c.l.b16 %v590
        %v606 = vpack.c.b16 %v603, %v602
        %v607 = vpack.c.b16 %v605, %v604
        %vm610 = vcmask 261120
        %v612 = vsel %vm610, %v586, 0
        %614 = vmatprep.subr.bf16.mxu0 0
        %615 = vmatpush1.bf16.msra.mxu0 %v606
        %616 = vmatprep.subr.bf16.mxu0 0
        %617 = vmatpush1.bf16.msra.mxu0 %v607
        %618 = vmatprep.subr.bf16.mxu0 0
        %619 = vmatpush1.bf16.msra.mxu0 0
        %620 = vmatprep.subr.bf16.mxu0 0
        %621 = vmatpush1.bf16.msra.mxu0 0
        %622 = vmatprep.subr.bf16.mxu0 0
        %623 = vmatpush1.bf16.msra.mxu0 0
        %624 = vmatprep.subr.bf16.mxu0 0
        %625 = vmatpush1.bf16.msra.mxu0 0
        %626 = vmatprep.subr.bf16.mxu0 0
        %627 = vmatpush1.bf16.msra.mxu0 0
        %628 = vmatprep.subr.bf16.mxu0 0
        %629 = vmatpush1.bf16.msra.mxu0 0
        %630 = vmatprep.subr.bf16.mxu0 0
        %631 = vmatpush1.bf16.msra.mxu0 0
        %632 = vmatprep.subr.bf16.mxu0 0
        %633 = vmatpush1.bf16.msra.mxu0 0
        %634 = vmatprep.subr.bf16.mxu0 0
        %635 = vmatpush1.bf16.msra.mxu0 0
        %636 = vmatprep.subr.bf16.mxu0 0
        %637 = vmatpush1.bf16.msra.mxu0 0
        %638 = vmatprep.subr.bf16.mxu0 0
        %639 = vmatpush1.bf16.msra.mxu0 0
        %640 = vmatprep.subr.bf16.mxu0 0
        %641 = vmatpush1.bf16.msra.mxu0 0
        %642 = vmatprep.subr.bf16.mxu0 0
        %643 = vmatpush1.bf16.msra.mxu0 0
        %644 = vmatprep.subr.bf16.mxu0 0
        %645 = vmatpush1.bf16.msra.mxu0 0
        %646 = vmatprep.mubr.bf16.mxu0 0
        %647 = vmatmul.mubr.bf16.gmra.mrb[0].mxu0 %v612
        %v648 = vpop.f32.mrb[0].mxu0
        %v649 = vadd.f32 %v596, %v648
        %v650 = vpop.f32.mrb[0].mxu0
        %v651 = vpop.f32.mrb[0].mxu0
        %v652 = vpop.f32.mrb[0].mxu0
        %653 = vdwg.mxu0
        %v654 = vxor.u32 %v649, 2147483648
        %v655 = vmul.f32 %v654, 1.442695
        %v656 = vpow.pop %v655
        %v657 = vadd.f32 %v656, 1.0
        %v658 = vrcp.pop %v657
        %v659 = vmul.f32 1.0, %v658
        %v660 = vld [vmem:[%s6] sm:$0xf]
        %v661 = vld [vmem:[%s6 + $0x4] sm:$0xf]
        %v662 = vld [vmem:[%s6 + $0x8] sm:$0xf]
        %v663 = vld [vmem:[%s6 + $0xc] sm:$0xf]
        %v664 = vld [vmem:[%s7] sm:$0x1]
        %v666 = vlaneseq
        %v667 = vshrl.u32 %v666, 7
        %v668 = vsub.s32 0, %v667
        %v669 = vrot.slane %v664, %v668
        %v675 = vunpack.c.l.b16 %v660
        %v676 = vunpack.c.l.b16 %v661
        %v677 = vunpack.c.l.b16 %v662
        %v678 = vunpack.c.l.b16 %v663
        %v679 = vpack.c.b16 %v676, %v675
        %v680 = vpack.c.b16 %v678, %v677
        %683 = vmatprep.subr.bf16.mxu0 0
        %684 = vmatpush1.bf16.msra.mxu0 %v679
        %685 = vmatprep.subr.bf16.mxu0 0
        %686 = vmatpush1.bf16.msra.mxu0 %v680
        %687 = vmatprep.subr.bf16.mxu0 0
        %688 = vmatpush1.bf16.msra.mxu0 0
        %689 = vmatprep.subr.bf16.mxu0 0
        %690 = vmatpush1.bf16.msra.mxu0 0
        %691 = vmatprep.subr.bf16.mxu0 0
        %692 = vmatpush1.bf16.msra.mxu0 0
        %693 = vmatprep.subr.bf16.mxu0 0
        %694 = vmatpush1.bf16.msra.mxu0 0
        %695 = vmatprep.subr.bf16.mxu0 0
        %696 = vmatpush1.bf16.msra.mxu0 0
        %697 = vmatprep.subr.bf16.mxu0 0
        %698 = vmatpush1.bf16.msra.mxu0 0
        %699 = vmatprep.subr.bf16.mxu0 0
        %700 = vmatpush1.bf16.msra.mxu0 0
        %701 = vmatprep.subr.bf16.mxu0 0
        %702 = vmatpush1.bf16.msra.mxu0 0
        %703 = vmatprep.subr.bf16.mxu0 0
        %704 = vmatpush1.bf16.msra.mxu0 0
        %705 = vmatprep.subr.bf16.mxu0 0
        %706 = vmatpush1.bf16.msra.mxu0 0
        %707 = vmatprep.subr.bf16.mxu0 0
        %708 = vmatpush1.bf16.msra.mxu0 0
        %709 = vmatprep.subr.bf16.mxu0 0
        %710 = vmatpush1.bf16.msra.mxu0 0
        %711 = vmatprep.subr.bf16.mxu0 0
        %712 = vmatpush1.bf16.msra.mxu0 0
        %713 = vmatprep.subr.bf16.mxu0 0
        %714 = vmatpush1.bf16.msra.mxu0 0
        %715 = vmatprep.mubr.bf16.mxu0 0
        %716 = vmatmul.mubr.bf16.gmra.mrb[0].mxu0 %v612
        %v717 = vpop.f32.mrb[0].mxu0
        %v718 = vadd.f32 %v669, %v717
        %v719 = vpop.f32.mrb[0].mxu0
        %v720 = vpop.f32.mrb[0].mxu0
        %v721 = vpop.f32.mrb[0].mxu0
        %722 = vdwg.mxu0
        %v723 = vxor.u32 %v718, 2147483648
        %v724 = vmul.f32 %v723, 1.442695
        %v725 = vpow.pop %v724
        %v726 = vadd.f32 %v725, 1.0
        %v727 = vrcp.pop %v726
        %v728 = vmul.f32 1.0, %v727
        %v729 = vld [vmem:[%s8] sm:$0xf]
        %v730 = vld [vmem:[%s8 + $0x4] sm:$0xf]
        %v731 = vld [vmem:[%s8 + $0x8] sm:$0xf]
        %v732 = vld [vmem:[%s8 + $0xc] sm:$0xf]
        %v733 = vld [vmem:[%s9] sm:$0x1]
        %v735 = vlaneseq
        %v736 = vshrl.u32 %v735, 7
        %v737 = vsub.s32 0, %v736
        %v738 = vrot.slane %v733, %v737
        %v744 = vunpack.c.l.b16 %v729
        %v745 = vunpack.c.l.b16 %v730
        %v746 = vunpack.c.l.b16 %v731
        %v747 = vunpack.c.l.b16 %v732
        %v748 = vpack.c.b16 %v745, %v744
        %v749 = vpack.c.b16 %v747, %v746
        %752 = vmatprep.subr.bf16.mxu0 0
        %753 = vmatpush1.bf16.msra.mxu0 %v748
        %754 = vmatprep.subr.bf16.mxu0 0
        %755 = vmatpush1.bf16.msra.mxu0 %v749
        %756 = vmatprep.subr.bf16.mxu0 0
        %757 = vmatpush1.bf16.msra.mxu0 0
        %758 = vmatprep.subr.bf16.mxu0 0
        %759 = vmatpush1.bf16.msra.mxu0 0
        %760 = vmatprep.subr.bf16.mxu0 0
        %761 = vmatpush1.bf16.msra.mxu0 0
        %762 = vmatprep.subr.bf16.mxu0 0
        %763 = vmatpush1.bf16.msra.mxu0 0
        %764 = vmatprep.subr.bf16.mxu0 0
        %765 = vmatpush1.bf16.msra.mxu0 0
        %766 = vmatprep.subr.bf16.mxu0 0
        %767 = vmatpush1.bf16.msra.mxu0 0
        %768 = vmatprep.subr.bf16.mxu0 0
        %769 = vmatpush1.bf16.msra.mxu0 0
        %770 = vmatprep.subr.bf16.mxu0 0
        %771 = vmatpush1.bf16.msra.mxu0 0
        %772 = vmatprep.subr.bf16.mxu0 0
        %773 = vmatpush1.bf16.msra.mxu0 0
        %774 = vmatprep.subr.bf16.mxu0 0
        %775 = vmatpush1.bf16.msra.mxu0 0
        %776 = vmatprep.subr.bf16.mxu0 0
        %777 = vmatpush1.bf16.msra.mxu0 0
        %778 = vmatprep.subr.bf16.mxu0 0
        %779 = vmatpush1.bf16.msra.mxu0 0
        %780 = vmatprep.subr.bf16.mxu0 0
        %781 = vmatpush1.bf16.msra.mxu0 0
        %782 = vmatprep.subr.bf16.mxu0 0
        %783 = vmatpush1.bf16.msra.mxu0 0
        %784 = vmatprep.mubr.bf16.mxu0 0
        %785 = vmatmul.mubr.bf16.gmra.mrb[0].mxu0 %v612
        %v786 = vpop.f32.mrb[0].mxu0
        %v787 = vadd.f32 %v738, %v786
        %v788 = vpop.f32.mrb[0].mxu0
        %v789 = vpop.f32.mrb[0].mxu0
        %v790 = vpop.f32.mrb[0].mxu0
        %791 = vdwg.mxu0
        %v792 = vld [vmem:[%s1] sm:$0xff]
        %v793 = vld [vmem:[%s1 + $0x8] sm:$0xff]
        %v794 = vld [vmem:[%s1 + $0x10] sm:$0xff]
        %v795 = vld [vmem:[%s1 + $0x18] sm:$0xff]
        %v796 = vld [vmem:[#allocation2] sm:$0xf]
        %v797 = vld [vmem:[%s3] sm:$0xff]
        %v798 = vld [vmem:[%s3 + $0x8] sm:$0xff]
        %v799 = vld [vmem:[%s3 + $0x10] sm:$0xff]
        %v800 = vld [vmem:[%s3 + $0x18] sm:$0xff]
        %v801 = vadd.f32 %v659, 1e-06
        %v802 = vadd.f32 %v728, 1e-06
        %v803 = vsel %vm610, %v728, 0.0
        %v804 = vrot.slane %v803, 4
        %v805 = vadd.f32 %v803, %v804
        %v806 = vrot.slane %v805, 2
        %v807 = vadd.f32 %v805, %v806
        %v808 = vrot.slane %v807, 1
        %v809 = vadd.f32 %v807, %v808
        %v810 = vsel %vm610, %v659, 0.0
        %v811 = vrot.slane %v810, 4
        %v812 = vadd.f32 %v810, %v811
        %v813 = vrot.slane %v812, 2
        %v814 = vadd.f32 %v812, %v813
        %v815 = vrot.slane %v814, 1
        %v816 = vadd.f32 %v814, %v815
        %v817 = vadd.f32 %v809, 1e-06
        %v818 = vmul.f32 %v801, %v817
        %v819 = vadd.f32 %v816, 1e-06
        %v820 = vmul.f32 %v802, %v819
        %v822 = vsel %vm610, %v818, 0
        %v825 = vsel %vm610, %v820, 0
        %827 = vmatprep.subr.mxu0 0.0
        %828 = vmatpush1.msra.mxu0 %v792
        %829 = vmatprep.subr.mxu0 0.0
        %830 = vmatpush1.msra.mxu0 %v793
        %831 = vmatprep.subr.mxu0 0.0
        %832 = vmatpush1.msra.mxu0 %v794
        %833 = vmatprep.subr.mxu0 0.0
        %834 = vmatpush1.msra.mxu0 %v795
        %835 = vmatprep.subr.mxu0 0.0
        %836 = vmatpush1.msra.mxu0 0.0
        %837 = vmatprep.subr.mxu0 0.0
        %838 = vmatpush1.msra.mxu0 0.0
        %839 = vmatprep.subr.mxu0 0.0
        %840 = vmatpush1.msra.mxu0 0.0
        %841 = vmatprep.subr.mxu0 0.0
        %842 = vmatpush1.msra.mxu0 0.0
        %843 = vmatprep.subr.mxu0 0.0
        %844 = vmatpush1.msra.mxu0 0.0
        %845 = vmatprep.subr.mxu0 0.0
        %846 = vmatpush1.msra.mxu0 0.0
        %847 = vmatprep.subr.mxu0 0.0
        %848 = vmatpush1.msra.mxu0 0.0
        %849 = vmatprep.subr.mxu0 0.0
        %850 = vmatpush1.msra.mxu0 0.0
        %851 = vmatprep.subr.mxu0 0.0
        %852 = vmatpush1.msra.mxu0 0.0
        %853 = vmatprep.subr.mxu0 0.0
        %854 = vmatpush1.msra.mxu0 0.0
        %855 = vmatprep.subr.mxu0 0.0
        %856 = vmatpush1.msra.mxu0 0.0
        %857 = vmatprep.subr.mxu0 0.0
        %858 = vmatpush1.msra.mxu0 0.0
        %859 = vmatprep.subr.mxu0 0.0
        %860 = vmatpush1.msra.mxu0 0.0
        %861 = vmatprep.subr.mxu0 0.0
        %862 = vmatpush1.msra.mxu0 0.0
        %863 = vmatprep.subr.mxu0 0.0
        %864 = vmatpush1.msra.mxu0 0.0
        %865 = vmatprep.subr.mxu0 0.0
        %866 = vmatpush1.msra.mxu0 0.0
        %867 = vmatprep.subr.mxu0 0.0
        %868 = vmatpush1.msra.mxu0 0.0
        %869 = vmatprep.subr.mxu0 0.0
        %870 = vmatpush1.msra.mxu0 0.0
        %871 = vmatprep.subr.mxu0 0.0
        %872 = vmatpush1.msra.mxu0 0.0
        %873 = vmatprep.subr.mxu0 0.0
        %874 = vmatpush1.msra.mxu0 0.0
        %875 = vmatprep.subr.mxu0 0.0
        %876 = vmatpush1.msra.mxu0 0.0
        %877 = vmatprep.subr.mxu0 0.0
        %878 = vmatpush1.msra.mxu0 0.0
        %879 = vmatprep.subr.mxu0 0.0
        %880 = vmatpush1.msra.mxu0 0.0
        %881 = vmatprep.subr.mxu0 0.0
        %882 = vmatpush1.msra.mxu0 0.0
        %883 = vmatprep.subr.mxu0 0.0
        %884 = vmatpush1.msra.mxu0 0.0
        %885 = vmatprep.subr.mxu0 0.0
        %886 = vmatpush1.msra.mxu0 0.0
        %887 = vmatprep.subr.mxu0 0.0
        %888 = vmatpush1.msra.mxu0 0.0
        %889 = vmatprep.subr.mxu0 0.0
        %890 = vmatpush1.msra.mxu0 0.0
        %891 = vmatprep.mubr.f32.mxu0 0.0
        %892 = vmatmul.mubr.f32.gmra.mrb[0].mxu0 %v822
        %v893 = vpop.f32.mrb[0].mxu0
        %v894 = vadd.f32 0.0, %v893
        %v895 = vpop.f32.mrb[0].mxu0
        %896 = vmatprep.mubr.f32.mxu0 0.0
        %897 = vmatmul.mubr.f32.gmra.mrb[0].mxu0 %v825
        %v898 = vpop.f32.mrb[0].mxu0
        %v899 = vadd.f32 0.0, %v898
        %v900 = vpop.f32.mrb[0].mxu0
        %901 = vdwg.mxu0
        %v902 = vrcp.pop %v894
        %v903 = vmul.f32 1.0, %v902
        %v904 = vrcp.pop %v899
        %v905 = vmul.f32 1.0, %v904
        %vm906 = vcmask 31744
        %v908 = vsel %vm906, %v905, 0
        %v911 = vsel %vm906, %v903, 0
        %vm913 = vcmask 1043456
        %v915 = vsel %vm913, %v796, 0
        %917 = vmatprep.subr.mxu0 0.0
        %918 = vmatpush1.msra.mxu0 %v915
        %919 = vmatprep.subr.mxu0 0.0
        %920 = vmatpush1.msra.mxu0 0.0
        %921 = vmatprep.subr.mxu0 0.0
        %922 = vmatpush1.msra.mxu0 0.0
        %923 = vmatprep.subr.mxu0 0.0
        %924 = vmatpush1.msra.mxu0 0.0
        %925 = vmatprep.subr.mxu0 0.0
        %926 = vmatpush1.msra.mxu0 0.0
        %927 = vmatprep.subr.mxu0 0.0
        %928 = vmatpush1.msra.mxu0 0.0
        %929 = vmatprep.subr.mxu0 0.0
        %930 = vmatpush1.msra.mxu0 0.0
        %931 = vmatprep.subr.mxu0 0.0
        %932 = vmatpush1.msra.mxu0 0.0
        %933 = vmatprep.subr.mxu0 0.0
        %934 = vmatpush1.msra.mxu0 0.0
        %935 = vmatprep.subr.mxu0 0.0
        %936 = vmatpush1.msra.mxu0 0.0
        %937 = vmatprep.subr.mxu0 0.0
        %938 = vmatpush1.msra.mxu0 0.0
        %939 = vmatprep.subr.mxu0 0.0
        %940 = vmatpush1.msra.mxu0 0.0
        %941 = vmatprep.subr.mxu0 0.0
        %942 = vmatpush1.msra.mxu0 0.0
        %943 = vmatprep.subr.mxu0 0.0
        %944 = vmatpush1.msra.mxu0 0.0
        %945 = vmatprep.subr.mxu0 0.0
        %946 = vmatpush1.msra.mxu0 0.0
        %947 = vmatprep.subr.mxu0 0.0
        %948 = vmatpush1.msra.mxu0 0.0
        %949 = vmatprep.subr.mxu0 0.0
        %950 = vmatpush1.msra.mxu0 0.0
        %951 = vmatprep.subr.mxu0 0.0
        %952 = vmatpush1.msra.mxu0 0.0
        %953 = vmatprep.subr.mxu0 0.0
        %954 = vmatpush1.msra.mxu0 0.0
        %955 = vmatprep.subr.mxu0 0.0
        %956 = vmatpush1.msra.mxu0 0.0
        %957 = vmatprep.subr.mxu0 0.0
        %958 = vmatpush1.msra.mxu0 0.0
        %959 = vmatprep.subr.mxu0 0.0
        %960 = vmatpush1.msra.mxu0 0.0
        %961 = vmatprep.subr.mxu0 0.0
        %962 = vmatpush1.msra.mxu0 0.0
        %963 = vmatprep.subr.mxu0 0.0
        %964 = vmatpush1.msra.mxu0 0.0
        %965 = vmatprep.subr.mxu0 0.0
        %966 = vmatpush1.msra.mxu0 0.0
        %967 = vmatprep.subr.mxu0 0.0
        %968 = vmatpush1.msra.mxu0 0.0
        %969 = vmatprep.subr.mxu0 0.0
        %970 = vmatpush1.msra.mxu0 0.0
        %971 = vmatprep.subr.mxu0 0.0
        %972 = vmatpush1.msra.mxu0 0.0
        %973 = vmatprep.subr.mxu0 0.0
        %974 = vmatpush1.msra.mxu0 0.0
        %975 = vmatprep.subr.mxu0 0.0
        %976 = vmatpush1.msra.mxu0 0.0
        %977 = vmatprep.subr.mxu0 0.0
        %978 = vmatpush1.msra.mxu0 0.0
        %979 = vmatprep.subr.mxu0 0.0
        %980 = vmatpush1.msra.mxu0 0.0
        %981 = vmatprep.mubr.f32.mxu0 0.0
        %982 = vmatmul.mubr.f32.gmra.mrb[0].mxu0 %v908
        %v983 = vpop.f32.mrb[0].mxu0
        %v984 = vadd.f32 0.0, %v983
        %v985 = vpop.f32.mrb[0].mxu0
        %986 = vmatprep.mubr.f32.mxu0 0.0
        %987 = vmatmul.mubr.f32.gmra.mrb[0].mxu0 %v911
        %v988 = vpop.f32.mrb[0].mxu0
        %v989 = vadd.f32 0.0, %v988
        %v990 = vpop.f32.mrb[0].mxu0
        %991 = vdwg.mxu0
        %v992 = vmul.f32 %v728, %v984
        %v993 = vsel %vm610, %v992, 0.0
        %v994 = vrot.slane %v993, 4
        %v995 = vadd.f32 %v993, %v994
        %v996 = vrot.slane %v995, 2
        %v997 = vadd.f32 %v995, %v996
        %v998 = vrot.slane %v997, 1
        %v999 = vadd.f32 %v997, %v998
        %v1000 = vmul.f32 %v659, %v989
        %v1001 = vsel %vm610, %v1000, 0.0
        %v1002 = vrot.slane %v1001, 4
        %v1003 = vadd.f32 %v1001, %v1002
        %v1004 = vrot.slane %v1003, 2
        %v1005 = vadd.f32 %v1003, %v1004
        %v1006 = vrot.slane %v1005, 1
        %v1007 = vadd.f32 %v1005, %v1006
        %v1008 = vadd.f32 %v999, 1e-06
        %v1009 = vmul.f32 %v801, %v1008
        %v1010 = vadd.f32 %v1007, 1e-06
        %v1011 = vmul.f32 %v802, %v1010
        %v1013 = vsel %vm610, %v1009, 0
        %v1016 = vsel %vm610, %v1011, 0
        %1018 = vmatprep.subr.mxu0 0.0
        %1019 = vmatpush1.msra.mxu0 %v792
        %1020 = vmatprep.subr.mxu0 0.0
        %1021 = vmatpush1.msra.mxu0 %v793
        %1022 = vmatprep.subr.mxu0 0.0
        %1023 = vmatpush1.msra.mxu0 %v794
        %1024 = vmatprep.subr.mxu0 0.0
        %1025 = vmatpush1.msra.mxu0 %v795
        %1026 = vmatprep.subr.mxu0 0.0
        %1027 = vmatpush1.msra.mxu0 0.0
        %1028 = vmatprep.subr.mxu0 0.0
        %1029 = vmatpush1.msra.mxu0 0.0
        %1030 = vmatprep.subr.mxu0 0.0
        %1031 = vmatpush1.msra.mxu0 0.0
        %1032 = vmatprep.subr.mxu0 0.0
        %1033 = vmatpush1.msra.mxu0 0.0
        %1034 = vmatprep.subr.mxu0 0.0
        %1035 = vmatpush1.msra.mxu0 0.0
        %1036 = vmatprep.subr.mxu0 0.0
        %1037 = vmatpush1.msra.mxu0 0.0
        %1038 = vmatprep.subr.mxu0 0.0
        %1039 = vmatpush1.msra.mxu0 0.0
        %1040 = vmatprep.subr.mxu0 0.0
        %1041 = vmatpush1.msra.mxu0 0.0
        %1042 = vmatprep.subr.mxu0 0.0
        %1043 = vmatpush1.msra.mxu0 0.0
        %1044 = vmatprep.subr.mxu0 0.0
        %1045 = vmatpush1.msra.mxu0 0.0
        %1046 = vmatprep.subr.mxu0 0.0
        %1047 = vmatpush1.msra.mxu0 0.0
        %1048 = vmatprep.subr.mxu0 0.0
        %1049 = vmatpush1.msra.mxu0 0.0
        %1050 = vmatprep.subr.mxu0 0.0
        %1051 = vmatpush1.msra.mxu0 0.0
        %1052 = vmatprep.subr.mxu0 0.0
        %1053 = vmatpush1.msra.mxu0 0.0
        %1054 = vmatprep.subr.mxu0 0.0
        %1055 = vmatpush1.msra.mxu0 0.0
        %1056 = vmatprep.subr.mxu0 0.0
        %1057 = vmatpush1.msra.mxu0 0.0
        %1058 = vmatprep.subr.mxu0 0.0
        %1059 = vmatpush1.msra.mxu0 0.0
        %1060 = vmatprep.subr.mxu0 0.0
        %1061 = vmatpush1.msra.mxu0 0.0
        %1062 = vmatprep.subr.mxu0 0.0
        %1063 = vmatpush1.msra.mxu0 0.0
        %1064 = vmatprep.subr.mxu0 0.0
        %1065 = vmatpush1.msra.mxu0 0.0
        %1066 = vmatprep.subr.mxu0 0.0
        %1067 = vmatpush1.msra.mxu0 0.0
        %1068 = vmatprep.subr.mxu0 0.0
        %1069 = vmatpush1.msra.mxu0 0.0
        %1070 = vmatprep.subr.mxu0 0.0
        %1071 = vmatpush1.msra.mxu0 0.0
        %1072 = vmatprep.subr.mxu0 0.0
        %1073 = vmatpush1.msra.mxu0 0.0
        %1074 = vmatprep.subr.mxu0 0.0
        %1075 = vmatpush1.msra.mxu0 0.0
        %1076 = vmatprep.subr.mxu0 0.0
        %1077 = vmatpush1.msra.mxu0 0.0
        %1078 = vmatprep.subr.mxu0 0.0
        %1079 = vmatpush1.msra.mxu0 0.0
        %1080 = vmatprep.subr.mxu0 0.0
        %1081 = vmatpush1.msra.mxu0 0.0
        %1082 = vmatprep.mubr.f32.mxu0 0.0
        %1083 = vmatmul.mubr.f32.gmra.mrb[0].mxu0 %v1013
        %v1084 = vpop.f32.mrb[0].mxu0
        %v1085 = vadd.f32 0.0, %v1084
        %v1086 = vpop.f32.mrb[0].mxu0
        %1087 = vmatprep.mubr.f32.mxu0 0.0
        %1088 = vmatmul.mubr.f32.gmra.mrb[0].mxu0 %v1016
        %v1089 = vpop.f32.mrb[0].mxu0
        %v1090 = vadd.f32 0.0, %v1089
        %v1091 = vpop.f32.mrb[0].mxu0
        %1092 = vdwg.mxu0
        %v1093 = vmax.f32 %v1090, -1.0
        %v1094 = vmin.f32 %v1093, 1.0
        %v1095 = vxor.u32 %v1085, 2147483648
        %v1096 = vmul.f32 %v1095, 1.442695
        %v1097 = vpow.pop %v1096
        %v1098 = vadd.f32 %v1097, 1.0
        %v1099 = vrcp.pop %v1098
        %v1100 = vmul.f32 1.0, %v1099
        %v1101 = vsel %vm906, %v1094, -inf
        %v1102 = vrot.slane %v1101, 4
        %v1103 = vmax.f32 %v1101, %v1102
        %v1104 = vrot.slane %v1103, 2
        %v1105 = vmax.f32 %v1103, %v1104
        %v1106 = vrot.slane %v1105, 1
        %v1107 = vmax.f32 %v1105, %v1106
        %v1108 = vsub.f32 %v1094, %v1107
        %v1109 = vmul.f32 %v1108, 1.442695
        %v1110 = vpow.pop %v1109
        %v1111 = vsel %vm906, %v1110, 0.0
        %v1112 = vrot.slane %v1111, 4
        %v1113 = vadd.f32 %v1111, %v1112
        %v1114 = vrot.slane %v1113, 2
        %v1115 = vadd.f32 %v1113, %v1114
        %v1116 = vrot.slane %v1115, 1
        %v1117 = vadd.f32 %v1115, %v1116
        %v1118 = vrcp.pop %v1117
        %v1119 = vmul.f32 %v1110, %v1118
        %v1120 = vmul.f32 %v1119, 8.0
        %v1122 = vsel %vm906, %v1120, 0
        %v1125 = vsel %vm906, %v1100, 0
        %1127 = vmatprep.subr.mxu0 0.0
        %1128 = vmatpush1.msra.mxu0 %v915
        %1129 = vmatprep.subr.mxu0 0.0
        %1130 = vmatpush1.msra.mxu0 0.0
        %1131 = vmatprep.subr.mxu0 0.0
        %1132 = vmatpush1.msra.mxu0 0.0
        %1133 = vmatprep.subr.mxu0 0.0
        %1134 = vmatpush1.msra.mxu0 0.0
        %1135 = vmatprep.subr.mxu0 0.0
        %1136 = vmatpush1.msra.mxu0 0.0
        %1137 = vmatprep.subr.mxu0 0.0
        %1138 = vmatpush1.msra.mxu0 0.0
        %1139 = vmatprep.subr.mxu0 0.0
        %1140 = vmatpush1.msra.mxu0 0.0
        %1141 = vmatprep.subr.mxu0 0.0
        %1142 = vmatpush1.msra.mxu0 0.0
        %1143 = vmatprep.subr.mxu0 0.0
        %1144 = vmatpush1.msra.mxu0 0.0
        %1145 = vmatprep.subr.mxu0 0.0
        %1146 = vmatpush1.msra.mxu0 0.0
        %1147 = vmatprep.subr.mxu0 0.0
        %1148 = vmatpush1.msra.mxu0 0.0
        %1149 = vmatprep.subr.mxu0 0.0
        %1150 = vmatpush1.msra.mxu0 0.0
        %1151 = vmatprep.subr.mxu0 0.0
        %1152 = vmatpush1.msra.mxu0 0.0
        %1153 = vmatprep.subr.mxu0 0.0
        %1154 = vmatpush1.msra.mxu0 0.0
        %1155 = vmatprep.subr.mxu0 0.0
        %1156 = vmatpush1.msra.mxu0 0.0
        %1157 = vmatprep.subr.mxu0 0.0
        %1158 = vmatpush1.msra.mxu0 0.0
        %1159 = vmatprep.subr.mxu0 0.0
        %1160 = vmatpush1.msra.mxu0 0.0
        %1161 = vmatprep.subr.mxu0 0.0
        %1162 = vmatpush1.msra.mxu0 0.0
        %1163 = vmatprep.subr.mxu0 0.0
        %1164 = vmatpush1.msra.mxu0 0.0
        %1165 = vmatprep.subr.mxu0 0.0
        %1166 = vmatpush1.msra.mxu0 0.0
        %1167 = vmatprep.subr.mxu0 0.0
        %1168 = vmatpush1.msra.mxu0 0.0
        %1169 = vmatprep.subr.mxu0 0.0
        %1170 = vmatpush1.msra.mxu0 0.0
        %1171 = vmatprep.subr.mxu0 0.0
        %1172 = vmatpush1.msra.mxu0 0.0
        %1173 = vmatprep.subr.mxu0 0.0
        %1174 = vmatpush1.msra.mxu0 0.0
        %1175 = vmatprep.subr.mxu0 0.0
        %1176 = vmatpush1.msra.mxu0 0.0
        %1177 = vmatprep.subr.mxu0 0.0
        %1178 = vmatpush1.msra.mxu0 0.0
        %1179 = vmatprep.subr.mxu0 0.0
        %1180 = vmatpush1.msra.mxu0 0.0
        %1181 = vmatprep.subr.mxu0 0.0
        %1182 = vmatpush1.msra.mxu0 0.0
        %1183 = vmatprep.subr.mxu0 0.0
        %1184 = vmatpush1.msra.mxu0 0.0
        %1185 = vmatprep.subr.mxu0 0.0
        %1186 = vmatpush1.msra.mxu0 0.0
        %1187 = vmatprep.subr.mxu0 0.0
        %1188 = vmatpush1.msra.mxu0 0.0
        %1189 = vmatprep.subr.mxu0 0.0
        %1190 = vmatpush1.msra.mxu0 0.0
        %1191 = vmatprep.mubr.f32.mxu0 0.0
        %1192 = vmatmul.mubr.f32.gmra.mrb[0].mxu0 %v1122
        %v1193 = vpop.f32.mrb[0].mxu0
        %v1194 = vadd.f32 0.0, %v1193
        %v1195 = vpop.f32.mrb[0].mxu0
        %1196 = vmatprep.mubr.f32.mxu0 0.0
        %1197 = vmatmul.mubr.f32.gmra.mrb[0].mxu0 %v1125
        %v1198 = vpop.f32.mrb[0].mxu0
        %v1199 = vadd.f32 0.0, %v1198
        %v1200 = vpop.f32.mrb[0].mxu0
        %1201 = vdwg.mxu0
        %v1202 = vmul.f32 %v787, %v1194
        %v1203 = vpack.c.bf16 %v1202, %v1202
        %v1204 = vpack.c.bf16 %v728, %v728
        %1205 = vxpose.xlu0.c.b16.start [1/8] %v1204, 128
        %1206 = vxpose.xlu0.c.b16.cont [2/8] 0, 128
        %1207 = vxpose.xlu0.c.b16.cont [3/8] 0, 128
        %1208 = vxpose.xlu0.c.b16.cont [4/8] 0, 128
        %1209 = vxpose.xlu0.c.b16.cont [5/8] 0, 128
        %1210 = vxpose.xlu0.c.b16.cont [6/8] 0, 128
        %1211 = vxpose.xlu0.c.b16.cont [7/8] 0, 128
        %1212 = vxpose.xlu0.c.b16.end [8/8] 0, 128
        %v1213 = vpop.trf.xlu0
        %v1214 = vpop.trf.xlu0
        %v1215 = vpop.trf.xlu0
        %v1216 = vpop.trf.xlu0
        %v1217 = vpop.trf.xlu0
        %v1218 = vpop.trf.xlu0
        %v1219 = vpop.trf.xlu0
        %v1220 = vpop.trf.xlu0
        %vm1221 = vcmask 64512
        %v1223 = vsel %vm1221, %v1213, 0
        %v1226 = vsel %vm1221, %v1214, 0
        %v1229 = vsel %vm913, %v1203, 0
        %1231 = vmatprep.subr.bf16.mxu0 0
        %1232 = vmatpush1.bf16.msra.mxu0 %v1229
        %1233 = vmatprep.subr.bf16.mxu0 0
        %1234 = vmatpush1.bf16.msra.mxu0 0
        %1235 = vmatprep.subr.bf16.mxu0 0
        %1236 = vmatpush1.bf16.msra.mxu0 0
        %1237 = vmatprep.subr.bf16.mxu0 0
        %1238 = vmatpush1.bf16.msra.mxu0 0
        %1239 = vmatprep.subr.bf16.mxu0 0
        %1240 = vmatpush1.bf16.msra.mxu0 0
        %1241 = vmatprep.subr.bf16.mxu0 0
        %1242 = vmatpush1.bf16.msra.mxu0 0
        %1243 = vmatprep.subr.bf16.mxu0 0
        %1244 = vmatpush1.bf16.msra.mxu0 0
        %1245 = vmatprep.subr.bf16.mxu0 0
        %1246 = vmatpush1.bf16.msra.mxu0 0
        %1247 = vmatprep.subr.bf16.mxu0 0
        %1248 = vmatpush1.bf16.msra.mxu0 0
        %1249 = vmatprep.subr.bf16.mxu0 0
        %1250 = vmatpush1.bf16.msra.mxu0 0
        %1251 = vmatprep.subr.bf16.mxu0 0
        %1252 = vmatpush1.bf16.msra.mxu0 0
        %1253 = vmatprep.subr.bf16.mxu0 0
        %1254 = vmatpush1.bf16.msra.mxu0 0
        %1255 = vmatprep.subr.bf16.mxu0 0
        %1256 = vmatpush1.bf16.msra.mxu0 0
        %1257 = vmatprep.subr.bf16.mxu0 0
        %1258 = vmatpush1.bf16.msra.mxu0 0
        %1259 = vmatprep.subr.bf16.mxu0 0
        %1260 = vmatpush1.bf16.msra.mxu0 0
        %1261 = vmatprep.subr.bf16.mxu0 0
        %1262 = vmatpush1.bf16.msra.mxu0 0
        %1263 = vmatprep.mubr.bf16.mxu0 0
        %1264 = vmatmul.mubr.bf16.gmra.mrb[0].mxu0 %v1223
        %v1265 = vpop.f32.mrb[0].mxu0
        %v1266 = vadd.f32 0.0, %v1265
        %v1267 = vpop.f32.mrb[0].mxu0
        %v1268 = vpop.f32.mrb[0].mxu0
        %v1269 = vadd.f32 0.0, %v1268
        %v1270 = vpop.f32.mrb[0].mxu0
        %1271 = vmatprep.mubr.bf16.mxu0 0
        %1272 = vmatmul.mubr.bf16.gmra.mrb[0].mxu0 %v1226
        %v1273 = vpop.f32.mrb[0].mxu0
        %v1274 = vadd.f32 0.0, %v1273
        %v1275 = vpop.f32.mrb[0].mxu0
        %v1276 = vpop.f32.mrb[0].mxu0
        %v1277 = vadd.f32 0.0, %v1276
        %v1278 = vpop.f32.mrb[0].mxu0
        %1279 = vdwg.mxu0
        %v1280 = vmul.f32 %v1266, %v797
        %v1281 = vmul.f32 %v1269, %v798
        %v1282 = vmul.f32 %v1274, %v799
        %v1283 = vmul.f32 %v1277, %v800
        %v1284 = vpack.c.bf16 %v1000, %v1000
        %v1285 = vpack.c.bf16 %v1281, %v1280
        %v1286 = vpack.c.bf16 %v1283, %v1282
        %v1288 = vsel %vm610, %v1284, 0
        %1290 = vmatprep.subr.bf16.mxu0 0
        %1291 = vmatpush1.bf16.msra.mxu0 %v1285
        %1292 = vmatprep.subr.bf16.mxu0 0
        %1293 = vmatpush1.bf16.msra.mxu0 %v1286
        %1294 = vmatprep.subr.bf16.mxu0 0
        %1295 = vmatpush1.bf16.msra.mxu0 0
        %1296 = vmatprep.subr.bf16.mxu0 0
        %1297 = vmatpush1.bf16.msra.mxu0 0
        %1298 = vmatprep.subr.bf16.mxu0 0
        %1299 = vmatpush1.bf16.msra.mxu0 0
        %1300 = vmatprep.subr.bf16.mxu0 0
        %1301 = vmatpush1.bf16.msra.mxu0 0
        %1302 = vmatprep.subr.bf16.mxu0 0
        %1303 = vmatpush1.bf16.msra.mxu0 0
        %1304 = vmatprep.subr.bf16.mxu0 0
        %1305 = vmatpush1.bf16.msra.mxu0 0
        %1306 = vmatprep.subr.bf16.mxu0 0
        %1307 = vmatpush1.bf16.msra.mxu0 0
        %1308 = vmatprep.subr.bf16.mxu0 0
        %1309 = vmatpush1.bf16.msra.mxu0 0
        %1310 = vmatprep.subr.bf16.mxu0 0
        %1311 = vmatpush1.bf16.msra.mxu0 0
        %1312 = vmatprep.subr.bf16.mxu0 0
        %1313 = vmatpush1.bf16.msra.mxu0 0
        %1314 = vmatprep.subr.bf16.mxu0 0
        %1315 = vmatpush1.bf16.msra.mxu0 0
        %1316 = vmatprep.subr.bf16.mxu0 0
        %1317 = vmatpush1.bf16.msra.mxu0 0
        %1318 = vmatprep.subr.bf16.mxu0 0
        %1319 = vmatpush1.bf16.msra.mxu0 0
        %1320 = vmatprep.subr.bf16.mxu0 0
        %1321 = vmatpush1.bf16.msra.mxu0 0
        %1322 = vmatprep.mubr.bf16.mxu0 0
        %1323 = vmatmul.mubr.bf16.gmra.mrb[0].mxu0 %v1288
        %v1324 = vpop.f32.mrb[0].mxu0
        %v1325 = vadd.f32 0.0, %v1324
        %v1326 = vpop.f32.mrb[0].mxu0
        %v1327 = vpop.f32.mrb[0].mxu0
        %v1328 = vpop.f32.mrb[0].mxu0
        %1329 = vdwg.mxu0
        %v1330 = vmul.f32 %v1325, %v1199
        %v1331 = vpack.c.bf16 %v1330, %v1330
        %v1332 = vld [vmem:[%s10] sm:$0xf]
        %v1333 = vld [vmem:[%s10 + $0x4] sm:$0xf]
        %v1334 = vld [vmem:[%s10 + $0x8] sm:$0xf]
        %v1335 = vld [vmem:[%s10 + $0xc] sm:$0xf]
        %v1336 = vld [vmem:[%s11] sm:$0x1]
        %v1338 = vlaneseq
        %v1339 = vshrl.u32 %v1338, 7
        %v1340 = vsub.s32 0, %v1339
        %v1341 = vrot.slane %v1336, %v1340
        %v1347 = vunpack.c.l.b16 %v1332
        %v1348 = vunpack.c.l.b16 %v1333
        %v1349 = vunpack.c.l.b16 %v1334
        %v1350 = vunpack.c.l.b16 %v1335
        %v1351 = vpack.c.b16 %v1348, %v1347
        %v1352 = vpack.c.b16 %v1350, %v1349
        %v1356 = vsel %vm610, %v1331, 0
        %1358 = vmatprep.subr.bf16.mxu0 0
        %1359 = vmatpush1.bf16.msra.mxu0 %v1351
        %1360 = vmatprep.subr.bf16.mxu0 0
        %1361 = vmatpush1.bf16.msra.mxu0 %v1352
        %1362 = vmatprep.subr.bf16.mxu0 0
        %1363 = vmatpush1.bf16.msra.mxu0 0
        %1364 = vmatprep.subr.bf16.mxu0 0
        %1365 = vmatpush1.bf16.msra.mxu0 0
        %1366 = vmatprep.subr.bf16.mxu0 0
        %1367 = vmatpush1.bf16.msra.mxu0 0
        %1368 = vmatprep.subr.bf16.mxu0 0
        %1369 = vmatpush1.bf16.msra.mxu0 0
        %1370 = vmatprep.subr.bf16.mxu0 0
        %1371 = vmatpush1.bf16.msra.mxu0 0
        %1372 = vmatprep.subr.bf16.mxu0 0
        %1373 = vmatpush1.bf16.msra.mxu0 0
        %1374 = vmatprep.subr.bf16.mxu0 0
        %1375 = vmatpush1.bf16.msra.mxu0 0
        %1376 = vmatprep.subr.bf16.mxu0 0
        %1377 = vmatpush1.bf16.msra.mxu0 0
        %1378 = vmatprep.subr.bf16.mxu0 0
        %1379 = vmatpush1.bf16.msra.mxu0 0
        %1380 = vmatprep.subr.bf16.mxu0 0
        %1381 = vmatpush1.bf16.msra.mxu0 0
        %1382 = vmatprep.subr.bf16.mxu0 0
        %1383 = vmatpush1.bf16.msra.mxu0 0
        %1384 = vmatprep.subr.bf16.mxu0 0
        %1385 = vmatpush1.bf16.msra.mxu0 0
        %1386 = vmatprep.subr.bf16.mxu0 0
        %1387 = vmatpush1.bf16.msra.mxu0 0
        %1388 = vmatprep.subr.bf16.mxu0 0
        %1389 = vmatpush1.bf16.msra.mxu0 0
        %1390 = vmatprep.mubr.bf16.mxu0 0
        %1391 = vmatmul.mubr.bf16.gmra.mrb[0].mxu0 %v1356
        %v1392 = vpop.f32.mrb[0].mxu0
        %v1393 = vadd.f32 %v1341, %v1392
        %v1394 = vpop.f32.mrb[0].mxu0
        %v1395 = vpop.f32.mrb[0].mxu0
        %v1396 = vpop.f32.mrb[0].mxu0
        %1397 = vdwg.mxu0
        %v1398 = vadd.f32 %v585, %v1393
        %v1399 = vsel %vm610, %v1398, 0.0
        %1400 = vadd.xlane.f32.xlu0 %v1399
        %v1401 = vpop.xlane.xlu0 %1400
        %v1402 = vrcp.pop 32.0
        %v1403 = vmul.f32 %v1401, %v1402
        %v1404 = vsub.f32 %v1398, %v1403
        %v1405 = vmul.f32 %v1404, %v1404
        %v1406 = vsel %vm610, %v1405, 0.0
        %1407 = vadd.xlane.f32.xlu0 %v1406
        %v1408 = vpop.xlane.xlu0 %1407
        %v1409 = vmul.f32 %v1408, 0.032258064
        %v1410 = vrsqrt.pop %v1409
        %v1411 = vmul.f32 %v1409, %v1410
        %vm1412 = vcmp.eq.f32.partialorder %v1409, inf
        %v1413 = vsel %vm1412, %v1409, %v1411
        %vm1414 = vcmp.eq.f32.partialorder %v1409, 0.0
        %v1415 = vand.u32 %v1409, 2147483648
        %v1416 = vsel %vm1414, %v1415, %v1413
        %v1417 = vadd.f32 %v1416, 1e-06
        %v1418 = vrcp.pop %v1417
        %v1419 = vld [vmem:[%s12] sm:$0x1]
        %v1421 = vlaneseq
        %v1422 = vshrl.u32 %v1421, 7
        %v1423 = vsub.s32 0, %v1422
        %v1424 = vrot.slane %v1419, %v1423
        %v1426 = vmul.f32 %v1424, %v1404
        %v1427 = vmul.f32 %v1426, %v1418
        %v1428 = vld [vmem:[%s13] sm:$0x1]
        %v1430 = vlaneseq
        %v1431 = vshrl.u32 %v1430, 7
        %v1432 = vsub.s32 0, %v1431
        %v1433 = vrot.slane %v1428, %v1432
        %v1435 = vadd.f32 %v1427, %v1433
        %v1436 = vpack.c.bf16 %v1435, %v1435
        %v1437 = vld [vmem:[%s14] sm:$0xf]
        %v1438 = vld [vmem:[%s14 + $0x4] sm:$0xf]
        %v1439 = vld [vmem:[%s14 + $0x8] sm:$0xf]
        %v1440 = vld [vmem:[%s14 + $0xc] sm:$0xf]
        %v1441 = vld [vmem:[%s15] sm:$0x1]
        %v1443 = vlaneseq
        %v1444 = vshrl.u32 %v1443, 7
        %v1445 = vsub.s32 0, %v1444
        %v1446 = vrot.slane %v1441, %v1445
        %v1452 = vunpack.c.l.b16 %v1437
        %v1453 = vunpack.c.l.b16 %v1438
        %v1454 = vunpack.c.l.b16 %v1439
        %v1455 = vunpack.c.l.b16 %v1440
        %v1456 = vpack.c.b16 %v1453, %v1452
        %v1457 = vpack.c.b16 %v1455, %v1454
        %v1461 = vsel %vm610, %v1436, 0
        %1463 = vmatprep.subr.bf16.mxu0 0
        %1464 = vmatpush1.bf16.msra.mxu0 %v1456
        %1465 = vmatprep.subr.bf16.mxu0 0
        %1466 = vmatpush1.bf16.msra.mxu0 %v1457
        %1467 = vmatprep.subr.bf16.mxu0 0
        %1468 = vmatpush1.bf16.msra.mxu0 0
        %1469 = vmatprep.subr.bf16.mxu0 0
        %1470 = vmatpush1.bf16.msra.mxu0 0
        %1471 = vmatprep.subr.bf16.mxu0 0
        %1472 = vmatpush1.bf16.msra.mxu0 0
        %1473 = vmatprep.subr.bf16.mxu0 0
        %1474 = vmatpush1.bf16.msra.mxu0 0
        %1475 = vmatprep.subr.bf16.mxu0 0
        %1476 = vmatpush1.bf16.msra.mxu0 0
        %1477 = vmatprep.subr.bf16.mxu0 0
        %1478 = vmatpush1.bf16.msra.mxu0 0
        %1479 = vmatprep.subr.bf16.mxu0 0
        %1480 = vmatpush1.bf16.msra.mxu0 0
        %1481 = vmatprep.subr.bf16.mxu0 0
        %1482 = vmatpush1.bf16.msra.mxu0 0
        %1483 = vmatprep.subr.bf16.mxu0 0
        %1484 = vmatpush1.bf16.msra.mxu0 0
        %1485 = vmatprep.subr.bf16.mxu0 0
        %1486 = vmatpush1.bf16.msra.mxu0 0
        %1487 = vmatprep.subr.bf16.mxu0 0
        %1488 = vmatpush1.bf16.msra.mxu0 0
        %1489 = vmatprep.subr.bf16.mxu0 0
        %1490 = vmatpush1.bf16.msra.mxu0 0
        %1491 = vmatprep.subr.bf16.mxu0 0
        %1492 = vmatpush1.bf16.msra.mxu0 0
        %1493 = vmatprep.subr.bf16.mxu0 0
        %1494 = vmatpush1.bf16.msra.mxu0 0
        %1495 = vmatprep.mubr.bf16.mxu0 0
        %1496 = vmatmul.mubr.bf16.gmra.mrb[0].mxu0 %v1461
        %v1497 = vpop.f32.mrb[0].mxu0
        %v1498 = vadd.f32 %v1446, %v1497
        %v1499 = vpop.f32.mrb[0].mxu0
        %v1500 = vpop.f32.mrb[0].mxu0
        %v1501 = vpop.f32.mrb[0].mxu0
        %1502 = vdwg.mxu0
        %v1503 = vmax.f32 %v1498, 0.0
        %v1504 = vpack.c.bf16 %v1503, %v1503
        %v1505 = vld [vmem:[%s16] sm:$0xf]
        %v1506 = vld [vmem:[%s16 + $0x4] sm:$0xf]
        %v1507 = vld [vmem:[%s16 + $0x8] sm:$0xf]
        %v1508 = vld [vmem:[%s16 + $0xc] sm:$0xf]
        %v1509 = vld [vmem:[%s16 + $0x10] sm:$0xf]
        %v1510 = vld [vmem:[%s16 + $0x14] sm:$0xf]
        %v1511 = vld [vmem:[%s16 + $0x18] sm:$0xf]
        %v1512 = vld [vmem:[%s16 + $0x1c] sm:$0xf]
        %v1513 = vld [vmem:[%s16 + $0x20] sm:$0xf]
        %v1514 = vld [vmem:[%s16 + $0x24] sm:$0xf]
        %v1515 = vld [vmem:[%s16 + $0x28] sm:$0xf]
        %v1516 = vld [vmem:[%s16 + $0x2c] sm:$0xf]
        %v1517 = vld [vmem:[%s16 + $0x30] sm:$0xf]
        %v1518 = vld [vmem:[%s16 + $0x34] sm:$0xf]
        %v1519 = vld [vmem:[%s16 + $0x38] sm:$0xf]
        %v1520 = vld [vmem:[%s16 + $0x3c] sm:$0xf]
        %v1521 = vld [vmem:[%s17] sm:$0x1]
        %v1523 = vlaneseq
        %v1524 = vshrl.u32 %v1523, 7
        %v1525 = vsub.s32 0, %v1524
        %v1526 = vrot.slane %v1521, %v1525
        %v1544 = vunpack.c.l.b16 %v1505
        %v1545 = vunpack.c.l.b16 %v1506
        %v1546 = vunpack.c.l.b16 %v1507
        %v1547 = vunpack.c.l.b16 %v1508
        %v1548 = vunpack.c.l.b16 %v1509
        %v1549 = vunpack.c.l.b16 %v1510
        %v1550 = vunpack.c.l.b16 %v1511
        %v1551 = vunpack.c.l.b16 %v1512
        %v1552 = vunpack.c.l.b16 %v1513
        %v1553 = vunpack.c.l.b16 %v1514
        %v1554 = vunpack.c.l.b16 %v1515
        %v1555 = vunpack.c.l.b16 %v1516
        %v1556 = vunpack.c.l.b16 %v1517
        %v1557 = vunpack.c.l.b16 %v1518
        %v1558 = vunpack.c.l.b16 %v1519
        %v1559 = vunpack.c.l.b16 %v1520
        %v1560 = vpack.c.b16 %v1545, %v1544
        %v1561 = vpack.c.b16 %v1547, %v1546
        %v1562 = vpack.c.b16 %v1549, %v1548
        %v1563 = vpack.c.b16 %v1551, %v1550
        %v1564 = vpack.c.b16 %v1553, %v1552
        %v1565 = vpack.c.b16 %v1555, %v1554
        %v1566 = vpack.c.b16 %v1557, %v1556
        %v1567 = vpack.c.b16 %v1559, %v1558
        %1576 = vmatprep.subr.bf16.mxu0 0
        %1577 = vmatpush1.bf16.msra.mxu0 %v1560
        %1578 = vmatprep.subr.bf16.mxu0 0
        %1579 = vmatpush1.bf16.msra.mxu0 %v1561
        %1580 = vmatprep.subr.bf16.mxu0 0
        %1581 = vmatpush1.bf16.msra.mxu0 %v1562
        %1582 = vmatprep.subr.bf16.mxu0 0
        %1583 = vmatpush1.bf16.msra.mxu0 %v1563
        %1584 = vmatprep.subr.bf16.mxu0 0
        %1585 = vmatpush1.bf16.msra.mxu0 %v1564
        %1586 = vmatprep.subr.bf16.mxu0 0
        %1587 = vmatpush1.bf16.msra.mxu0 %v1565
        %1588 = vmatprep.subr.bf16.mxu0 0
        %1589 = vmatpush1.bf16.msra.mxu0 %v1566
        %1590 = vmatprep.subr.bf16.mxu0 0
        %1591 = vmatpush1.bf16.msra.mxu0 %v1567
        %1592 = vmatprep.subr.bf16.mxu0 0
        %1593 = vmatpush1.bf16.msra.mxu0 0
        %1594 = vmatprep.subr.bf16.mxu0 0
        %1595 = vmatpush1.bf16.msra.mxu0 0
        %1596 = vmatprep.subr.bf16.mxu0 0
        %1597 = vmatpush1.bf16.msra.mxu0 0
        %1598 = vmatprep.subr.bf16.mxu0 0
        %1599 = vmatpush1.bf16.msra.mxu0 0
        %1600 = vmatprep.subr.bf16.mxu0 0
        %1601 = vmatpush1.bf16.msra.mxu0 0
        %1602 = vmatprep.subr.bf16.mxu0 0
        %1603 = vmatpush1.bf16.msra.mxu0 0
        %1604 = vmatprep.subr.bf16.mxu0 0
        %1605 = vmatpush1.bf16.msra.mxu0 0
        %1606 = vmatprep.subr.bf16.mxu0 0
        %1607 = vmatpush1.bf16.msra.mxu0 0
        %1608 = vmatprep.mubr.bf16.mxu0 0
        %1609 = vmatmul.mubr.bf16.gmra.mrb[0].mxu0 %v1504
        %v1610 = vpop.f32.mrb[0].mxu0
        %v1611 = vadd.f32 %v1526, %v1610
        %v1612 = vpop.f32.mrb[0].mxu0
        %v1613 = vpop.f32.mrb[0].mxu0
        %v1614 = vpop.f32.mrb[0].mxu0
        %1615 = vdwg.mxu0
        %v1616 = vadd.f32 %v1398, %v1611
        %1617 = vst.msk [vmem:[%s579] sm:$0xff] %vm610, %v1616
        %s1618 = sand.u32 %s424, 1
        %s1619 = scalar_lea.sflag [#allocation4], %s1618
        %s1620 = sand.u32 %s424, 1
        %s1621 = smul.addr %s1620, 8
        %s1622 = scalar_lea.vmem [#allocation5], %s1621
        // Predicated region
        $region97: #{tpu_custom_call.1} parent=91 // pred_check
          %p1623 = pneg %p434
        $region98: #{tpu_custom_call.1} parent=91 // pred_check_branch
          %1625 = sbr.rel (%p1623) target = $region100
        $region99: #{tpu_custom_call.1} parent=91 // pred_region
          %s1627 = ssub.s32 128, 128
          %1628 = vsyncadd %s1619, %s1627
          %s1629 = smul.addr %s33, 128
          %s1630 = scalar_lea.hbm %s18, %s1629
          %s1632 = sshll.u32 %s1622, 4
          %s1633 = int_to_ptr.vmem [resolvable:$true] %s1632
          %1635 = dma.vmem_to_hbm [thread:$0]  %s1633, 128, %s1630, %s1619
        $region100: #{tpu_custom_call.1} parent=91 // pred_fallthru
          _
      $region92: #{tpu_custom_call.1} parent=5 // pred_fallthru
        _
      %p1636 = scmp.le.s32.totalorder 2, %s28
      // Predicated region
      $region101: #{tpu_custom_call.1} parent=5 // pred_check
        %p1637 = pneg %p1636
      $region102: #{tpu_custom_call.1} parent=5 // pred_check_branch
        %1639 = sbr.rel (%p1637) target = $region104
      $region103: #{tpu_custom_call.1} parent=5 // pred_region
        %s1640 = ssub.s32 %s28, 2
        // Predicated region
        $region105: #{tpu_custom_call.1} parent=103 // pred_check
          %p1641 = pneg %p440
        $region106: #{tpu_custom_call.1} parent=103 // pred_check_branch
          %1643 = sbr.rel (%p1641) target = $region108
        $region107: #{tpu_custom_call.1} parent=103 // pred_region
          %s1644 = sand.u32 %s425, 1
          %s1645 = scalar_lea.sflag [#allocation4], %s1644
          %s1646 = sand.u32 %s425, 1
          %s1647 = smul.addr %s1646, 8
          %s1648 = scalar_lea.vmem [#allocation5], %s1647
          %1649 = dma.done %s1645, 128
        $region108: #{tpu_custom_call.1} parent=103 // pred_fallthru
          _
      $region104: #{tpu_custom_call.1} parent=5 // pred_fallthru
        _
    $region6: #{tpu_custom_call.1} parent=1 // loop_footer
      %s32 = sadd.s32 1, %s28
    $region7: #{tpu_custom_call.1} parent=1 // loop_footer_branch
      %27 = sbr.rel target = $region3
    $region8: #{tpu_custom_call.1} parent=1 // loop_exit
      _
    %1650 = vsyncpa [#allocation3], 1
    %s1651 = scalar_lea.sflag [#allocation3], 1
    %1652 = vsyncpa %s1651, 1
    %1653 = vsyncpa [#allocation4], 1
    %s1654 = scalar_lea.sflag [#allocation4], 1
    %1655 = vsyncpa %s1654, 1

</llo_original>
